<compile_context>
chip_gen: v5e
topology: v5e:2x2
jax: 0.10.0
libtpu: 0.0.40
codegen_flags: <defaults>
</compile_context>

<pallas_src>
import jax
import jax.numpy as jnp
import numpy as np
from jax.experimental import pallas as pl
from jax.experimental.pallas import tpu as pltpu


# ----------------------------------------------------------------------------
# Per-level 1x1-conv kernel with the YOLO output permute fused into the store.
# ----------------------------------------------------------------------------
def _head_level_kernel(x_ref, w_ref, b_ref, o_ref):
    """One (batch, spatial-tile) grid step.

      x_ref: (Cin, T)          activations (NCHW level, spatial flattened)
      w_ref: (naxs, Cin, no)   per-anchor 1x1-conv weights
      b_ref: (naxs, 1, no)     per-anchor biases (f32)
      o_ref: (naxs, T, no)     output tile, already (anchor, spatial, channel)
    """
    # One 2-D transpose (XLU; free under the DMA-bound budget).  Upcast to f32
    # first so the transpose / matmul path is identical for f32 and bf16
    # streaming dtypes and accumulation is always f32.
    xt = jnp.transpose(x_ref[...].astype(jnp.float32))        # (T, Cin)
    naxs = w_ref.shape[0]
    for a in range(naxs):                                      # tiny static unroll
        w_a = w_ref[a].astype(jnp.float32)                     # (Cin, no)
        y = jnp.dot(xt, w_a, preferred_element_type=jnp.float32) + b_ref[a]
        o_ref[a] = y.astype(o_ref.dtype)                       # (T, no)


def head_level_conv(x_lvl, w_anch, b_anch, *, lane_tile_cap=512,
                    out_dtype=jnp.float32):
    """x_lvl : (bs, Cin, HW)       activations of one pyramid level
       w_anch: (naxs, Cin, no)     per-anchor weights
       b_anch: (naxs, 1, no)       per-anchor biases (f32)
       returns (bs, naxs, HW, no)."""
    bs, cin, hw = x_lvl.shape
    naxs, _, no = w_anch.shape
    assert lane_tile_cap % 128 == 0

    if hw <= lane_tile_cap:
        # Whole level in one tile: block dims equal the full array dims, which
        # is always a legal TPU block regardless of (8,128) divisibility.
        lane_tile, n_tiles = hw, 1
    else:
        # Large level: 512-lane tiles; last tile may be ragged (Pallas masks
        # the out-of-bounds columns on load and the stores past HW).
        lane_tile = lane_tile_cap
        n_tiles = pl.cdiv(hw, lane_tile)

    return pl.pallas_call(
        _head_level_kernel,
        out_shape=jax.ShapeDtypeStruct((bs, naxs, hw, no), out_dtype),
        grid_spec=pltpu.PrefetchScalarGridSpec(
            num_scalar_prefetch=0,
            grid=(bs, n_tiles),
            in_specs=[
                # activations: pick batch b and spatial tile t; Cin whole.
                pl.BlockSpec((None, cin, lane_tile), lambda b, t: (b, 0, t)),
                # weights / bias: tiny, resident (constant block index).
                pl.BlockSpec((naxs, cin, no), lambda b, t: (0, 0, 0)),
                pl.BlockSpec((naxs, 1, no), lambda b, t: (0, 0, 0)),
            ],
            out_specs=pl.BlockSpec((None, naxs, lane_tile, no),
                                   lambda b, t: (b, 0, t, 0)),
        ),
        compiler_params=pltpu.CompilerParams(
            # Pure map over both axes (no cross-tile accumulation) -> both
            # "parallel" so v7x's second TensorCore gets work even at bs=1.
            dimension_semantics=("parallel", "parallel"),
        ),
    )(x_lvl, w_anch, b_anch)


# ----------------------------------------------------------------------------
# HEADS module (JAX/Pallas version)
# ----------------------------------------------------------------------------
class HeadsPallas:
    def __init__(self, nc=80, anchors=(), ch=(), key=jax.random.PRNGKey(0),
                 compute_dtype=jnp.float32, out_dtype=jnp.float32,
                 lane_tile_cap=512):
        self.nc = nc
        self.nl = len(anchors)
        self.naxs = len(anchors[0])
        self.no = 5 + nc
        self.cout = self.no * self.naxs
        self.ch = tuple(ch)
        self.compute_dtype = compute_dtype
        self.out_dtype = out_dtype
        # 512 is safe inside v5e's 16 MiB default scoped VMEM; can be raised to
        # 1024 on v6e/v7x (re-check VMEM if Cout is also grown).
        self.lane_tile_cap = lane_tile_cap
        self.stride = jnp.array([8.0, 16.0, 32.0], dtype=jnp.float32)

        # anchors buffer: unused in forward; mirrors the PyTorch construction,
        # which (like the original) is hard-coded for the 3-level / 6-value
        # anchor configuration.
        anchors_ = jnp.asarray(anchors, dtype=jnp.float32).reshape(self.nl, -1, 2)
        stride_rep = jnp.tile(self.stride.reshape(1, 3), (6, 1)).T.reshape(3, 3, 2)
        self.anchors = anchors_ / stride_rep

        # Per-level conv params (Conv2d-style uniform init), kept in f32 for
        # the pure-JAX reference.
        self.weights, self.biases = [], []
        for in_channels in ch:
            key, kw, kb = jax.random.split(key, 3)
            bound = 1.0 / np.sqrt(in_channels)
            w = jax.random.uniform(kw, (in_channels, self.cout), jnp.float32,
                                   minval=-bound, maxval=bound)
            b = jax.random.uniform(kb, (self.cout,), jnp.float32,
                                   minval=-bound, maxval=bound)
            self.weights.append(w)
            self.biases.append(b)

        # Kernel-side params: per-anchor layout (naxs, Cin, no) so the fused
        # output permute needs no weight shuffling at runtime.  Weights stream
        # in compute_dtype (bf16 halves their bytes too, though they are tiny);
        # bias stays f32 (added after the f32 accumulation).
        self.w_anch, self.b_anch = [], []
        for w, b, cin in zip(self.weights, self.biases, ch):
            wa = w.reshape(cin, self.naxs, self.no).transpose(1, 0, 2)
            self.w_anch.append(wa.astype(compute_dtype))            # (naxs,Cin,no)
            self.b_anch.append(b.reshape(self.naxs, 1, self.no))    # (naxs,1,no) f32

    def __call__(self, x):
        """x: list of nl NCHW arrays (bs, ch[i], gy, gx).
        Returns list of arrays (bs, naxs, gy, gx, 5 + nc)."""
        outs = []
        for i, xi in enumerate(x):
            bs, cin, gy, gx = xi.shape
            hw = gy * gx
            # Free reshape (NCHW row-major): no standalone transpose pass.
            xr = xi.astype(self.compute_dtype).reshape(bs, cin, hw)
            y = head_level_conv(xr, self.w_anch[i], self.b_anch[i],
                                lane_tile_cap=self.lane_tile_cap,
                                out_dtype=self.out_dtype)            # (bs,naxs,hw,no)
            # Free reshape: hw -> (gy, gx); the permute itself was fused into
            # the kernel's store layout.
            outs.append(y.reshape(bs, self.naxs, gy, gx, self.no))
        return outs


# ----------------------------------------------------------------------------
# Pure-JAX reference for verification
# ----------------------------------------------------------------------------
def reference_forward(heads, x):
    outs = []
    for i in range(heads.nl):
        xi = x[i]
        bs, cin, gy, gx = xi.shape
        y = jnp.einsum("bchw,cd->bdhw", xi, heads.weights[i]) \
            + heads.biases[i][None, :, None, None]
        y = y.reshape(bs, heads.naxs, heads.no, gy, gx).transpose(0, 1, 3, 4, 2)
        outs.append(y)
    return outs


if __name__ == "__main__":
    key = jax.random.PRNGKey(0)

    # Small synthetic config: 3 levels, naxs = 6, nc = 3
    #   -> (5 + nc) * naxs = 48 output channels per level.
    nc = 3
    anchors = (
        (10.0, 13.0, 16.0, 30.0, 33.0, 23.0),
        (30.0, 61.0, 62.0, 45.0, 59.0, 119.0),
        (116.0, 90.0, 156.0, 198.0, 373.0, 326.0),
    )
    ch = (8, 16, 32)
    spatial = (16, 8, 4)   # strides 8 / 16 / 32
    bs = 2

    key, kparam = jax.random.split(key)
    heads = HeadsPallas(nc=nc, anchors=anchors, ch=ch, key=kparam)

    x = []
    for c, s in zip(ch, spatial):
        key, kx = jax.random.split(key)
        x.append(jax.random.normal(kx, (bs, c, s, s), dtype=jnp.float32))

    # f32 streaming path: exact check against the pure-JAX reference.
    outs = heads(x)
    outs = [jax.block_until_ready(o) for o in outs]
    refs = reference_forward(heads, x)
    for i, (o, r) in enumerate(zip(outs, refs)):
        expected_shape = (bs, heads.naxs, spatial[i], spatial[i], 5 + nc)
        assert o.shape == expected_shape, (o.shape, expected_shape)
        np.testing.assert_allclose(np.asarray(o), np.asarray(r),
                                   rtol=1e-5, atol=1e-5)

    # bf16 streaming path (halves read-side HBM bytes; f32 accumulation stays
    # inside the kernel).  Tolerance gated by dtype.
    heads_bf16 = HeadsPallas(nc=nc, anchors=anchors, ch=ch, key=kparam,
                             compute_dtype=jnp.bfloat16)
    outs_bf16 = [jax.block_until_ready(o) for o in heads_bf16(x)]
    for o, r in zip(outs_bf16, refs):
        np.testing.assert_allclose(np.asarray(o), np.asarray(r),
                                   rtol=5e-2, atol=5e-2)

    print("KERNEL_OK")
</pallas_src>

<mosaic_0001>
module attributes {stable_mosaic.version = 11 : i64} {
  func.func @_head_level_kernel(%arg0: i32, %arg1: i32, %arg2: memref<1x8x256xf32, #tpu.memory_space<vmem>>, %arg3: memref<6x8x8xf32, #tpu.memory_space<vmem>>, %arg4: memref<6x1x8xf32, #tpu.memory_space<vmem>>, %arg5: memref<1x6x256x8xf32, #tpu.memory_space<vmem>>) attributes {dimension_semantics = [#tpu.dimension_semantics<parallel>, #tpu.dimension_semantics<parallel>], iteration_bounds = array<i64: 2, 1>, scalar_prefetch = 0 : i64, scratch_operands = 0 : i64, tpu.core_type = #tpu.core_type<tc>, window_params = [{transform_indices = @transform_0, window_bounds = array<i64: 1, 8, 256>}, {pipeline_mode = #tpu.pipeline_mode<synchronous>, transform_indices = @transform_1, window_bounds = array<i64: 6, 8, 8>}, {pipeline_mode = #tpu.pipeline_mode<synchronous>, transform_indices = @transform_2, window_bounds = array<i64: 6, 1, 8>}, {transform_indices = @transform_3, window_bounds = array<i64: 1, 6, 256, 8>}]} {
    %c0 = arith.constant 0 : index
    %c0_0 = arith.constant 0 : index
    %c0_1 = arith.constant 0 : index
    %0 = vector.load %arg2[%c0, %c0_0, %c0_1] : memref<1x8x256xf32, #tpu.memory_space<vmem>>, vector<1x8x256xf32>
    %1 = vector.shape_cast %0 : vector<1x8x256xf32> to vector<8x256xf32>
    %2 = tpu.transpose %1, [1, 0] : vector<8x256xf32> -> vector<256x8xf32>
    %c0_2 = arith.constant 0 : index
    %c0_3 = arith.constant 0 : index
    %c0_4 = arith.constant 0 : index
    %3 = vector.load %arg3[%c0_2, %c0_3, %c0_4] : memref<6x8x8xf32, #tpu.memory_space<vmem>>, vector<1x8x8xf32>
    %4 = vector.shape_cast %3 : vector<1x8x8xf32> to vector<8x8xf32>
    %cst = arith.constant dense<0.000000e+00> : vector<256x8xf32>
    %5 = tpu.matmul %2, %4, %cst {dimension_numbers = #tpu.dot_dimension_numbers<[1], [0], [0], [1], [0, 0, 1, 1], [], []>} : vector<256x8xf32>, vector<8x8xf32>, vector<256x8xf32> -> vector<256x8xf32>
    %c0_5 = arith.constant 0 : index
    %c0_6 = arith.constant 0 : index
    %c0_7 = arith.constant 0 : index
    %6 = vector.load %arg4[%c0_5, %c0_6, %c0_7] : memref<6x1x8xf32, #tpu.memory_space<vmem>>, vector<1x1x8xf32>
    %7 = vector.shape_cast %6 : vector<1x1x8xf32> to vector<1x8xf32>
    %8 = vector.broadcast %7 : vector<1x8xf32> to vector<256x8xf32>
    %9 = arith.addf %5, %8 : vector<256x8xf32>
    %c0_8 = arith.constant 0 : index
    %c0_9 = arith.constant 0 : index
    %c0_10 = arith.constant 0 : index
    %c0_11 = arith.constant 0 : index
    %10 = vector.load %arg5[%c0_8, %c0_9, %c0_10, %c0_11] : memref<1x6x256x8xf32, #tpu.memory_space<vmem>>, vector<1x1x256x8xf32>
    %11 = vector.shape_cast %10 : vector<1x1x256x8xf32> to vector<256x8xf32>
    %12 = vector.shape_cast %9 : vector<256x8xf32> to vector<1x1x256x8xf32>
    tpu.vector_store %arg5[%c0_8, %c0_9, %c0_10, %c0_11], %12 {strides = array<i32>} : memref<1x6x256x8xf32, #tpu.memory_space<vmem>>, vector<1x1x256x8xf32>,
    %c1 = arith.constant 1 : index
    %c0_12 = arith.constant 0 : index
    %c0_13 = arith.constant 0 : index
    %13 = vector.load %arg3[%c1, %c0_12, %c0_13] : memref<6x8x8xf32, #tpu.memory_space<vmem>>, vector<1x8x8xf32>
    %14 = vector.shape_cast %13 : vector<1x8x8xf32> to vector<8x8xf32>
    %cst_14 = arith.constant dense<0.000000e+00> : vector<256x8xf32>
    %15 = tpu.matmul %2, %14, %cst_14 {dimension_numbers = #tpu.dot_dimension_numbers<[1], [0], [0], [1], [0, 0, 1, 1], [], []>} : vector<256x8xf32>, vector<8x8xf32>, vector<256x8xf32> -> vector<256x8xf32>
    %c1_15 = arith.constant 1 : index
    %c0_16 = arith.constant 0 : index
    %c0_17 = arith.constant 0 : index
    %16 = vector.load %arg4[%c1_15, %c0_16, %c0_17] : memref<6x1x8xf32, #tpu.memory_space<vmem>>, vector<1x1x8xf32>
    %17 = vector.shape_cast %16 : vector<1x1x8xf32> to vector<1x8xf32>
    %18 = vector.broadcast %17 : vector<1x8xf32> to vector<256x8xf32>
    %19 = arith.addf %15, %18 : vector<256x8xf32>
    %c0_18 = arith.constant 0 : index
    %c1_19 = arith.constant 1 : index
    %c0_20 = arith.constant 0 : index
    %c0_21 = arith.constant 0 : index
    %20 = vector.load %arg5[%c0_18, %c1_19, %c0_20, %c0_21] : memref<1x6x256x8xf32, #tpu.memory_space<vmem>>, vector<1x1x256x8xf32>
    %21 = vector.shape_cast %20 : vector<1x1x256x8xf32> to vector<256x8xf32>
    %22 = vector.shape_cast %19 : vector<256x8xf32> to vector<1x1x256x8xf32>
    tpu.vector_store %arg5[%c0_18, %c1_19, %c0_20, %c0_21], %22 {strides = array<i32>} : memref<1x6x256x8xf32, #tpu.memory_space<vmem>>, vector<1x1x256x8xf32>,
    %c2 = arith.constant 2 : index
    %c0_22 = arith.constant 0 : index
    %c0_23 = arith.constant 0 : index
    %23 = vector.load %arg3[%c2, %c0_22, %c0_23] : memref<6x8x8xf32, #tpu.memory_space<vmem>>, vector<1x8x8xf32>
    %24 = vector.shape_cast %23 : vector<1x8x8xf32> to vector<8x8xf32>
    %cst_24 = arith.constant dense<0.000000e+00> : vector<256x8xf32>
    %25 = tpu.matmul %2, %24, %cst_24 {dimension_numbers = #tpu.dot_dimension_numbers<[1], [0], [0], [1], [0, 0, 1, 1], [], []>} : vector<256x8xf32>, vector<8x8xf32>, vector<256x8xf32> -> vector<256x8xf32>
    %c2_25 = arith.constant 2 : index
    %c0_26 = arith.constant 0 : index
    %c0_27 = arith.constant 0 : index
    %26 = vector.load %arg4[%c2_25, %c0_26, %c0_27] : memref<6x1x8xf32, #tpu.memory_space<vmem>>, vector<1x1x8xf32>
    %27 = vector.shape_cast %26 : vector<1x1x8xf32> to vector<1x8xf32>
    %28 = vector.broadcast %27 : vector<1x8xf32> to vector<256x8xf32>
    %29 = arith.addf %25, %28 : vector<256x8xf32>
    %c0_28 = arith.constant 0 : index
    %c2_29 = arith.constant 2 : index
    %c0_30 = arith.constant 0 : index
    %c0_31 = arith.constant 0 : index
    %30 = vector.load %arg5[%c0_28, %c2_29, %c0_30, %c0_31] : memref<1x6x256x8xf32, #tpu.memory_space<vmem>>, vector<1x1x256x8xf32>
    %31 = vector.shape_cast %30 : vector<1x1x256x8xf32> to vector<256x8xf32>
    %32 = vector.shape_cast %29 : vector<256x8xf32> to vector<1x1x256x8xf32>
    tpu.vector_store %arg5[%c0_28, %c2_29, %c0_30, %c0_31], %32 {strides = array<i32>} : memref<1x6x256x8xf32, #tpu.memory_space<vmem>>, vector<1x1x256x8xf32>,
    %c3 = arith.constant 3 : index
    %c0_32 = arith.constant 0 : index
    %c0_33 = arith.constant 0 : index
    %33 = vector.load %arg3[%c3, %c0_32, %c0_33] : memref<6x8x8xf32, #tpu.memory_space<vmem>>, vector<1x8x8xf32>
    %34 = vector.shape_cast %33 : vector<1x8x8xf32> to vector<8x8xf32>
    %cst_34 = arith.constant dense<0.000000e+00> : vector<256x8xf32>
    %35 = tpu.matmul %2, %34, %cst_34 {dimension_numbers = #tpu.dot_dimension_numbers<[1], [0], [0], [1], [0, 0, 1, 1], [], []>} : vector<256x8xf32>, vector<8x8xf32>, vector<256x8xf32> -> vector<256x8xf32>
    %c3_35 = arith.constant 3 : index
    %c0_36 = arith.constant 0 : index
    %c0_37 = arith.constant 0 : index
    %36 = vector.load %arg4[%c3_35, %c0_36, %c0_37] : memref<6x1x8xf32, #tpu.memory_space<vmem>>, vector<1x1x8xf32>
    %37 = vector.shape_cast %36 : vector<1x1x8xf32> to vector<1x8xf32>
    %38 = vector.broadcast %37 : vector<1x8xf32> to vector<256x8xf32>
    %39 = arith.addf %35, %38 : vector<256x8xf32>
    %c0_38 = arith.constant 0 : index
    %c3_39 = arith.constant 3 : index
    %c0_40 = arith.constant 0 : index
    %c0_41 = arith.constant 0 : index
    %40 = vector.load %arg5[%c0_38, %c3_39, %c0_40, %c0_41] : memref<1x6x256x8xf32, #tpu.memory_space<vmem>>, vector<1x1x256x8xf32>
    %41 = vector.shape_cast %40 : vector<1x1x256x8xf32> to vector<256x8xf32>
    %42 = vector.shape_cast %39 : vector<256x8xf32> to vector<1x1x256x8xf32>
    tpu.vector_store %arg5[%c0_38, %c3_39, %c0_40, %c0_41], %42 {strides = array<i32>} : memref<1x6x256x8xf32, #tpu.memory_space<vmem>>, vector<1x1x256x8xf32>,
    %c4 = arith.constant 4 : index
    %c0_42 = arith.constant 0 : index
    %c0_43 = arith.constant 0 : index
    %43 = vector.load %arg3[%c4, %c0_42, %c0_43] : memref<6x8x8xf32, #tpu.memory_space<vmem>>, vector<1x8x8xf32>
    %44 = vector.shape_cast %43 : vector<1x8x8xf32> to vector<8x8xf32>
    %cst_44 = arith.constant dense<0.000000e+00> : vector<256x8xf32>
    %45 = tpu.matmul %2, %44, %cst_44 {dimension_numbers = #tpu.dot_dimension_numbers<[1], [0], [0], [1], [0, 0, 1, 1], [], []>} : vector<256x8xf32>, vector<8x8xf32>, vector<256x8xf32> -> vector<256x8xf32>
    %c4_45 = arith.constant 4 : index
    %c0_46 = arith.constant 0 : index
    %c0_47 = arith.constant 0 : index
    %46 = vector.load %arg4[%c4_45, %c0_46, %c0_47] : memref<6x1x8xf32, #tpu.memory_space<vmem>>, vector<1x1x8xf32>
    %47 = vector.shape_cast %46 : vector<1x1x8xf32> to vector<1x8xf32>
    %48 = vector.broadcast %47 : vector<1x8xf32> to vector<256x8xf32>
    %49 = arith.addf %45, %48 : vector<256x8xf32>
    %c0_48 = arith.constant 0 : index
    %c4_49 = arith.constant 4 : index
    %c0_50 = arith.constant 0 : index
    %c0_51 = arith.constant 0 : index
    %50 = vector.load %arg5[%c0_48, %c4_49, %c0_50, %c0_51] : memref<1x6x256x8xf32, #tpu.memory_space<vmem>>, vector<1x1x256x8xf32>
    %51 = vector.shape_cast %50 : vector<1x1x256x8xf32> to vector<256x8xf32>
    %52 = vector.shape_cast %49 : vector<256x8xf32> to vector<1x1x256x8xf32>
    tpu.vector_store %arg5[%c0_48, %c4_49, %c0_50, %c0_51], %52 {strides = array<i32>} : memref<1x6x256x8xf32, #tpu.memory_space<vmem>>, vector<1x1x256x8xf32>,
    %c5 = arith.constant 5 : index
    %c0_52 = arith.constant 0 : index
    %c0_53 = arith.constant 0 : index
    %53 = vector.load %arg3[%c5, %c0_52, %c0_53] : memref<6x8x8xf32, #tpu.memory_space<vmem>>, vector<1x8x8xf32>
    %54 = vector.shape_cast %53 : vector<1x8x8xf32> to vector<8x8xf32>
    %cst_54 = arith.constant dense<0.000000e+00> : vector<256x8xf32>
    %55 = tpu.matmul %2, %54, %cst_54 {dimension_numbers = #tpu.dot_dimension_numbers<[1], [0], [0], [1], [0, 0, 1, 1], [], []>} : vector<256x8xf32>, vector<8x8xf32>, vector<256x8xf32> -> vector<256x8xf32>
    %c5_55 = arith.constant 5 : index
    %c0_56 = arith.constant 0 : index
    %c0_57 = arith.constant 0 : index
    %56 = vector.load %arg4[%c5_55, %c0_56, %c0_57] : memref<6x1x8xf32, #tpu.memory_space<vmem>>, vector<1x1x8xf32>
    %57 = vector.shape_cast %56 : vector<1x1x8xf32> to vector<1x8xf32>
    %58 = vector.broadcast %57 : vector<1x8xf32> to vector<256x8xf32>
    %59 = arith.addf %55, %58 : vector<256x8xf32>
    %c0_58 = arith.constant 0 : index
    %c5_59 = arith.constant 5 : index
    %c0_60 = arith.constant 0 : index
    %c0_61 = arith.constant 0 : index
    %60 = vector.load %arg5[%c0_58, %c5_59, %c0_60, %c0_61] : memref<1x6x256x8xf32, #tpu.memory_space<vmem>>, vector<1x1x256x8xf32>
    %61 = vector.shape_cast %60 : vector<1x1x256x8xf32> to vector<256x8xf32>
    %62 = vector.shape_cast %59 : vector<256x8xf32> to vector<1x1x256x8xf32>
    tpu.vector_store %arg5[%c0_58, %c5_59, %c0_60, %c0_61], %62 {strides = array<i32>} : memref<1x6x256x8xf32, #tpu.memory_space<vmem>>, vector<1x1x256x8xf32>,
    return
  }
  func.func @transform_0(%arg0: i32, %arg1: i32) -> (i32, i32, i32) {
    %c0_i32 = arith.constant 0 : i32
    %c0_i32_0 = arith.constant 0 : i32
    return %arg0, %c0_i32, %arg1 : i32, i32, i32
  }
  func.func @transform_1(%arg0: i32, %arg1: i32) -> (i32, i32, i32) {
    %c0_i32 = arith.constant 0 : i32
    %c0_i32_0 = arith.constant 0 : i32
    %c0_i32_1 = arith.constant 0 : i32
    %c0_i32_2 = arith.constant 0 : i32
    return %c0_i32, %c0_i32_0, %c0_i32_1 : i32, i32, i32
  }
  func.func @transform_2(%arg0: i32, %arg1: i32) -> (i32, i32, i32) {
    %c0_i32 = arith.constant 0 : i32
    %c0_i32_0 = arith.constant 0 : i32
    %c0_i32_1 = arith.constant 0 : i32
    %c0_i32_2 = arith.constant 0 : i32
    return %c0_i32, %c0_i32_0, %c0_i32_1 : i32, i32, i32
  }
  func.func @transform_3(%arg0: i32, %arg1: i32) -> (i32, i32, i32, i32) {
    %c0_i32 = arith.constant 0 : i32
    %c0_i32_0 = arith.constant 0 : i32
    %c0_i32_1 = arith.constant 0 : i32
    return %arg0, %c0_i32, %arg1, %c0_i32_0 : i32, i32, i32, i32
  }
}

</mosaic_0001>

<llo_original>
// kernel: tpu_custom_call.1
$region0: #{tpu_custom_call.1}
  #allocation0 [shape = 'u32[]', space=smem, size = 0x4, offset = 0x4, fixed_abs, tag = 'smem constant byte address 0x4 - core index']
  #allocation1 [shape = 'u32[72,128]{1,0:T(1,128)}', space=vmem, size = 0x9000, scoped, tag = 'internal scratch']
  %s0 = inlined_call_operand.hbm [shape: f32[2,8,256], index: 0, kind: input, shape index: {}]
  %s1 = inlined_call_operand.hbm [shape: f32[6,8,8], index: 1, kind: input, shape index: {}]
  %s2 = inlined_call_operand.hbm [shape: f32[6,1,8], index: 2, kind: input, shape index: {}]
  %s3 = inlined_call_operand.vmem [shape: f32[2,6,256,8], index: 3, kind: output, shape index: {}]
  %s4 = sld [smem:[#allocation0]]
  $region57: #{tpu_custom_call.1} parent=0
    _
  %s6 = ssub.s32 1, %s4
  %s7 = scalar_select 0, %s6, %s4
  $region1: #{tpu_custom_call.1} parent=0
    #allocation2 [shape = 'u8[16384]{0}', space=vmem, size = 0x4000, scoped, tag = 'input window, operand 0']
    #allocation3 [shape = 's32[2]{0}', space=sflag, size = 0x8, scoped, tag = 'scoped memory for tpu_custom_call.1']
    #allocation4 [shape = 'u8[24576]{0}', space=vmem, size = 0x6000, scoped, tag = 'input window, operand 1, single buffered']
    #allocation5 [shape = 's32[1]{0}', space=sflag, size = 0x4, scoped, tag = 'scoped memory for tpu_custom_call.1']
    #allocation6 [shape = 'u8[3072]{0}', space=vmem, size = 0xc00, scoped, tag = 'input window, operand 2, single buffered']
    %8 = vsyncpa [#allocation3], 0
    %s9 = scalar_lea.sflag [#allocation3], 1
    %10 = vsyncpa %s9, 0
    %11 = vsyncpa [#allocation5], 0
    loop: start=0, step=1, limit=4
    $region2: #{tpu_custom_call.1} parent=1 // loop_pre_header
      _
    $region3: #{tpu_custom_call.1} parent=1 // loop_header
      %s13 = sphi 0, %s17
      %p14 = scmp.ge.s32.totalorder %s13, 4
      %s20 = sphi 0, %s32
      %s21 = sphi 0, %s28
      %s22 = sphi 0, %s20
      %s23 = sphi 0, %s21
      %s24 = sphi 0, %s22
      %s25 = sphi 0, %s23
      %s37 = sphi 0, %s39
      %s40 = sphi 0, %s37
      %s41 = sphi 0, %s40
      %s57 = sphi 0, %s41
      %s61 = sphi 0, %s61
      %s63 = sphi 0, %s61
      %s64 = sphi 0, %s63
      %s78 = sphi 0, %s64
      %s82 = sphi 0, %s82
      %s84 = sphi 0, %s82
      %s85 = sphi 0, %s84
      %s99 = sphi 0, %s85
      %s107 = sphi 0, %s109
      %s110 = sphi 0, %s107
      %s111 = sphi 0, %s110
      %s127 = sphi 0, %s111
    $region4: #{tpu_custom_call.1} parent=1 // loop_header_branch
      %16 = sbr.rel (%p14) target = $region8
    $region5: #{tpu_custom_call.1} parent=1 // loop_body
      %s18 = ssub.s32 %s13, 1
      %s19 = ssub.s32 %s13, 2
      %s26 = sadd.s32 1, %s21
      %p27 = scmp.ge.s32.totalorder %s26, 1
      %s28 = scalar_select %p27, 0, %s26
      %s29 = sadd.s32 1, %s20
      %s30 = scalar_select %p27, %s29, %s20
      %p31 = scmp.ge.s32.totalorder %s30, 2
      %s32 = scalar_select %p31, 0, %s30
      %s33 = ssub.s32 %s20, %s32
      %s34 = ssub.s32 %s21, %s28
      %s35 = sor.u32 %s33, %s34
      %p36 = scmp.eq.s32.totalorder %s35, 0
      %s38 = sadd.s32 %s37, 1
      %s39 = scalar_select %p36, %s37, %s38
      %p42 = pneg %p36
      %p43 = scmp.eq.s32.totalorder %s13, 1
      %p44 = por %p42, %p43
      %p45 = scmp.ne.s32.totalorder %s37, %s40
      %p46 = scmp.eq.s32.totalorder %s13, 0
      %p47 = por %p45, %p46
      %p48 = scmp.ne.s32.totalorder %s37, %s40
      %p49 = scmp.eq.s32.totalorder %s18, 1
      %p50 = por %p48, %p49
      %p51 = scmp.ne.s32.totalorder %s40, %s41
      %p52 = scmp.eq.s32.totalorder %s18, 0
      %p53 = por %p51, %p52
      %p54 = scmp.ne.s32.totalorder %s40, %s41
      %p55 = scmp.eq.s32.totalorder %s19, 1
      %p56 = por %p54, %p55
      %p58 = scmp.ne.s32.totalorder %s41, %s57
      %p59 = scmp.eq.s32.totalorder %s19, 0
      %p60 = por %p58, %p59
      %s62 = sadd.s32 %s61, 1
      %p65 = scmp.eq.s32.totalorder %s13, 1
      %p66 = scmp.ne.s32.totalorder %s61, %s63
      %p67 = scmp.eq.s32.totalorder %s13, 0
      %p68 = por %p66, %p67
      %p69 = scmp.ne.s32.totalorder %s61, %s63
      %p70 = scmp.eq.s32.totalorder %s18, 1
      %p71 = por %p69, %p70
      %p72 = scmp.ne.s32.totalorder %s63, %s64
      %p73 = scmp.eq.s32.totalorder %s18, 0
      %p74 = por %p72, %p73
      %p75 = scmp.ne.s32.totalorder %s63, %s64
      %p76 = scmp.eq.s32.totalorder %s19, 1
      %p77 = por %p75, %p76
      %p79 = scmp.ne.s32.totalorder %s64, %s78
      %p80 = scmp.eq.s32.totalorder %s19, 0
      %p81 = por %p79, %p80
      %s83 = sadd.s32 %s82, 1
      %p86 = scmp.eq.s32.totalorder %s13, 1
      %p87 = scmp.ne.s32.totalorder %s82, %s84
      %p88 = scmp.eq.s32.totalorder %s13, 0
      %p89 = por %p87, %p88
      %p90 = scmp.ne.s32.totalorder %s82, %s84
      %p91 = scmp.eq.s32.totalorder %s18, 1
      %p92 = por %p90, %p91
      %p93 = scmp.ne.s32.totalorder %s84, %s85
      %p94 = scmp.eq.s32.totalorder %s18, 0
      %p95 = por %p93, %p94
      %p96 = scmp.ne.s32.totalorder %s84, %s85
      %p97 = scmp.eq.s32.totalorder %s19, 1
      %p98 = por %p96, %p97
      %p100 = scmp.ne.s32.totalorder %s85, %s99
      %p101 = scmp.eq.s32.totalorder %s19, 0
      %p102 = por %p100, %p101
      %s103 = ssub.s32 %s20, %s32
      %s104 = ssub.s32 %s21, %s28
      %s105 = sor.u32 %s103, %s104
      %p106 = scmp.eq.s32.totalorder %s105, 0
      %s108 = sadd.s32 %s107, 1
      %s109 = scalar_select %p106, %s107, %s108
      %p112 = pneg %p106
      %p113 = scmp.eq.s32.totalorder %s13, 1
      %p114 = por %p112, %p113
      %p115 = scmp.ne.s32.totalorder %s107, %s110
      %p116 = scmp.eq.s32.totalorder %s13, 0
      %p117 = por %p115, %p116
      %p118 = scmp.ne.s32.totalorder %s107, %s110
      %p119 = scmp.eq.s32.totalorder %s18, 1
      %p120 = por %p118, %p119
      %p121 = scmp.ne.s32.totalorder %s110, %s111
      %p122 = scmp.eq.s32.totalorder %s18, 0
      %p123 = por %p121, %p122
      %p124 = scmp.ne.s32.totalorder %s110, %s111
      %p125 = scmp.eq.s32.totalorder %s19, 1
      %p126 = por %p124, %p125
      %p128 = scmp.ne.s32.totalorder %s111, %s127
      %p129 = scmp.eq.s32.totalorder %s19, 0
      %p130 = por %p128, %p129
      %p131 = scmp.le.s32.totalorder 1, %s13
      %p132 = scmp.lt.s32.totalorder %s13, 3
      %p133 = pnand %p131, %p132
      %p134 = pneg %p133
      // Predicated region
      $region9: #{tpu_custom_call.1} parent=5 // pred_check
        _
      $region10: #{tpu_custom_call.1} parent=5 // pred_check_branch
        %136 = sbr.rel (%p133) target = $region12
      $region11: #{tpu_custom_call.1} parent=5 // pred_region
        %s137 = ssub.s32 %s13, 1
        // Predicated region
        $region13: #{tpu_custom_call.1} parent=11 // pred_check
          %p138 = pneg %p74
        $region14: #{tpu_custom_call.1} parent=11 // pred_check_branch
          %140 = sbr.rel (%p138) target = $region16
        $region15: #{tpu_custom_call.1} parent=11 // pred_region
          %142 = vsyncadd [#allocation5], 0
          %s143 = sshll.u32 %s1, 4
          %s144 = int_to_ptr.hbm [resolvable:$true] %s143
          %s145 = sshll.u32 [#allocation4], 4
          %s146 = int_to_ptr.vmem [resolvable:$true] %s145
          %151 = dma.hbm_to_vmem [thread:$0]  %s144, 768, %s146, [#allocation5], 128, 128, 8
        $region16: #{tpu_custom_call.1} parent=11 // pred_fallthru
          _
        // Predicated region
        $region17: #{tpu_custom_call.1} parent=11 // pred_check
          %p152 = pneg %p95
        $region18: #{tpu_custom_call.1} parent=11 // pred_check_branch
          %154 = sbr.rel (%p152) target = $region20
        $region19: #{tpu_custom_call.1} parent=11 // pred_region
          %156 = vsyncadd [#allocation5], 0
          %s157 = sshll.u32 %s2, 4
          %s158 = int_to_ptr.hbm [resolvable:$true] %s157
          %s159 = sshll.u32 [#allocation6], 4
          %s160 = int_to_ptr.vmem [resolvable:$true] %s159
          %165 = dma.hbm_to_vmem [thread:$0]  %s158, 96, %s160, [#allocation5], 16, 16, 1
        $region20: #{tpu_custom_call.1} parent=11 // pred_fallthru
          _
      $region12: #{tpu_custom_call.1} parent=5 // pred_fallthru
        _
      %p166 = scmp.lt.s32.totalorder %s13, 2
      // Predicated region
      $region21: #{tpu_custom_call.1} parent=5 // pred_check
        %p167 = pneg %p166
      $region22: #{tpu_custom_call.1} parent=5 // pred_check_branch
        %169 = sbr.rel (%p167) target = $region24
      $region23: #{tpu_custom_call.1} parent=5 // pred_region
        // Predicated region
        $region25: #{tpu_custom_call.1} parent=23 // pred_check
          %p170 = pneg %p47
        $region26: #{tpu_custom_call.1} parent=23 // pred_check_branch
          %172 = sbr.rel (%p170) target = $region28
        $region27: #{tpu_custom_call.1} parent=23 // pred_region
          %s173 = sand.u32 %s37, 1
          %s174 = scalar_lea.sflag [#allocation3], %s173
          %s175 = sand.u32 %s37, 1
          %s176 = smul.addr %s175, 16
          %s177 = scalar_lea.vmem [#allocation2], %s176
          %s178 = smul.u32 2, %s21
          %180 = vsyncadd %s174, 0
          %s181 = smul.addr %s20, 2
          %s182 = sadd.s32 %s178, %s181
          %s183 = smul.addr %s182, 8
          %s184 = scalar_lea.hbm %s0, %s183
          %s186 = sshll.u32 %s184, 4
          %s187 = int_to_ptr.hbm [resolvable:$true] %s186
          %s188 = sshll.u32 %s177, 4
          %s189 = int_to_ptr.vmem [resolvable:$true] %s188
          %191 = dma.hbm_to_vmem [thread:$0]  %s187, 256, %s189, %s174
        $region28: #{tpu_custom_call.1} parent=23 // pred_fallthru
          _
      $region24: #{tpu_custom_call.1} parent=5 // pred_fallthru
        _
      %p192 = scmp.le.s32.totalorder 1, %s13
      %p193 = scmp.lt.s32.totalorder %s13, 3
      %p194 = pnand %p192, %p193
      %p195 = pneg %p194
      // Predicated region
      $region29: #{tpu_custom_call.1} parent=5 // pred_check
        _
      $region30: #{tpu_custom_call.1} parent=5 // pred_check_branch
        %197 = sbr.rel (%p194) target = $region32
      $region31: #{tpu_custom_call.1} parent=5 // pred_region
        %s198 = ssub.s32 %s13, 1
        %s199 = sand.u32 %s40, 1
        %s200 = scalar_lea.sflag [#allocation3], %s199
        %s201 = sand.u32 %s40, 1
        %s202 = smul.addr %s201, 16
        %s203 = scalar_lea.vmem [#allocation2], %s202
        // Predicated region
        $region33: #{tpu_custom_call.1} parent=31 // pred_check
          %p204 = pneg %p53
        $region34: #{tpu_custom_call.1} parent=31 // pred_check_branch
          %206 = sbr.rel (%p204) target = $region36
        $region35: #{tpu_custom_call.1} parent=31 // pred_region
          %208 = dma.done %s200, 256
        $region36: #{tpu_custom_call.1} parent=31 // pred_fallthru
          _
        // Predicated region
        $region37: #{tpu_custom_call.1} parent=31 // pred_check
          %p209 = pneg %p74
        $region38: #{tpu_custom_call.1} parent=31 // pred_check_branch
          %211 = sbr.rel (%p209) target = $region40
        $region39: #{tpu_custom_call.1} parent=31 // pred_region
          %213 = dma.done [#allocation5], 768
        $region40: #{tpu_custom_call.1} parent=31 // pred_fallthru
          _
        // Predicated region
        $region41: #{tpu_custom_call.1} parent=31 // pred_check
          %p214 = pneg %p95
        $region42: #{tpu_custom_call.1} parent=31 // pred_check_branch
          %216 = sbr.rel (%p214) target = $region44
        $region43: #{tpu_custom_call.1} parent=31 // pred_region
          %218 = dma.done [#allocation5], 96
        $region44: #{tpu_custom_call.1} parent=31 // pred_fallthru
          _
        %s219 = sand.u32 %s40, 1
        %s220 = scalar_lea.sflag [#allocation3], %s219
        %s221 = sand.u32 %s40, 1
        %s222 = smul.addr %s221, 16
        %s223 = scalar_lea.vmem [#allocation2], %s222
        %p224 = pneg %p53
        %p225 = pneg %p50
        %p226 = pneg %p74
        %p227 = pneg %p71
        %p228 = pneg %p95
        %p229 = pneg %p92
        %p230 = pneg %p123
        %p231 = pneg %p120
        %s232 = smul.u32 32, %s23
        %p233 = scmp.lt.s32.totalorder %s22, 1
        %s234 = scalar_select %p233, %s22, 1
        %p235 = scmp.lt.s32.totalorder %s232, 31
        %s236 = scalar_select %p235, %s232, 31
        %s237 = smul.addr %s234, 192
        %s238 = sadd.s32 %s236, %s237
        %s239 = smul.addr %s238, 8
        %s240 = scalar_lea.vmem %s3, %s239
        %s241 = smul.u32 2, %s23
        %s242 = smul.u32 32, %s23
        %p243 = scmp.lt.s32.totalorder %s22, 1
        %s244 = scalar_select %p243, %s22, 1
        %p245 = scmp.lt.s32.totalorder %s242, 31
        %s246 = scalar_select %p245, %s242, 31
        %s247 = smul.addr %s244, 192
        %s248 = sadd.s32 %s246, %s247
        %s249 = smul.addr %s248, 8
        %s250 = scalar_lea.vmem %s3, %s249
        %s251 = smul.u32 32, %s23
        %v252 = vld [vmem:[%s203] sm:$0xff]
        %v253 = vld [vmem:[%s203 + $0x8] sm:$0xff]
        %254 = vxpose.xlu0.b32.start [1/16] %v252, 128
        %255 = vxpose.xlu0.b32.cont [2/16] 0.0, 128
        %256 = vxpose.xlu0.b32.cont [3/16] 0.0, 128
        %257 = vxpose.xlu0.b32.cont [4/16] 0.0, 128
        %258 = vxpose.xlu0.b32.cont [5/16] 0.0, 128
        %259 = vxpose.xlu0.b32.cont [6/16] 0.0, 128
        %260 = vxpose.xlu0.b32.cont [7/16] 0.0, 128
        %261 = vxpose.xlu0.b32.cont [8/16] 0.0, 128
        %262 = vxpose.xlu0.b32.cont [9/16] 0.0, 128
        %263 = vxpose.xlu0.b32.cont [10/16] 0.0, 128
        %264 = vxpose.xlu0.b32.cont [11/16] 0.0, 128
        %265 = vxpose.xlu0.b32.cont [12/16] 0.0, 128
        %266 = vxpose.xlu0.b32.cont [13/16] 0.0, 128
        %267 = vxpose.xlu0.b32.cont [14/16] 0.0, 128
        %268 = vxpose.xlu0.b32.cont [15/16] 0.0, 128
        %269 = vxpose.xlu0.b32.end [16/16] 0.0, 128
        %v270 = vpop.trf.xlu0
        %v271 = vpop.trf.xlu0
        %v272 = vpop.trf.xlu0
        %v273 = vpop.trf.xlu0
        %v274 = vpop.trf.xlu0
        %v275 = vpop.trf.xlu0
        %v276 = vpop.trf.xlu0
        %v277 = vpop.trf.xlu0
        %v278 = vpop.trf.xlu0
        %v279 = vpop.trf.xlu0
        %v280 = vpop.trf.xlu0
        %v281 = vpop.trf.xlu0
        %v282 = vpop.trf.xlu0
        %v283 = vpop.trf.xlu0
        %v284 = vpop.trf.xlu0
        %v285 = vpop.trf.xlu0
        %286 = vxpose.xlu0.b32.start [1/16] %v253, 128
        %287 = vxpose.xlu0.b32.cont [2/16] 0.0, 128
        %288 = vxpose.xlu0.b32.cont [3/16] 0.0, 128
        %289 = vxpose.xlu0.b32.cont [4/16] 0.0, 128
        %290 = vxpose.xlu0.b32.cont [5/16] 0.0, 128
        %291 = vxpose.xlu0.b32.cont [6/16] 0.0, 128
        %292 = vxpose.xlu0.b32.cont [7/16] 0.0, 128
        %293 = vxpose.xlu0.b32.cont [8/16] 0.0, 128
        %294 = vxpose.xlu0.b32.cont [9/16] 0.0, 128
        %295 = vxpose.xlu0.b32.cont [10/16] 0.0, 128
        %296 = vxpose.xlu0.b32.cont [11/16] 0.0, 128
        %297 = vxpose.xlu0.b32.cont [12/16] 0.0, 128
        %298 = vxpose.xlu0.b32.cont [13/16] 0.0, 128
        %299 = vxpose.xlu0.b32.cont [14/16] 0.0, 128
        %300 = vxpose.xlu0.b32.cont [15/16] 0.0, 128
        %301 = vxpose.xlu0.b32.end [16/16] 0.0, 128
        %v302 = vpop.trf.xlu0
        %v303 = vpop.trf.xlu0
        %v304 = vpop.trf.xlu0
        %v305 = vpop.trf.xlu0
        %v306 = vpop.trf.xlu0
        %v307 = vpop.trf.xlu0
        %v308 = vpop.trf.xlu0
        %v309 = vpop.trf.xlu0
        %v310 = vpop.trf.xlu0
        %v311 = vpop.trf.xlu0
        %v312 = vpop.trf.xlu0
        %v313 = vpop.trf.xlu0
        %v314 = vpop.trf.xlu0
        %v315 = vpop.trf.xlu0
        %v316 = vpop.trf.xlu0
        %v317 = vpop.trf.xlu0
        %v318 = vld [vmem:[#allocation4] sm:$0xff]
        %v319 = vld [vmem:[#allocation6] sm:$0x1]
        %v321 = vperm.slane %v319, 0
        %vm323 = vcmask 64512
        %v325 = vsel %vm323, %v270, 0
        %v328 = vsel %vm323, %v271, 0
        %v331 = vsel %vm323, %v272, 0
        %v334 = vsel %vm323, %v273, 0
        %v337 = vsel %vm323, %v274, 0
        %v340 = vsel %vm323, %v275, 0
        %v343 = vsel %vm323, %v276, 0
        %v346 = vsel %vm323, %v277, 0
        %v349 = vsel %vm323, %v278, 0
        %v352 = vsel %vm323, %v279, 0
        %v355 = vsel %vm323, %v280, 0
        %v358 = vsel %vm323, %v281, 0
        %v361 = vsel %vm323, %v282, 0
        %v364 = vsel %vm323, %v283, 0
        %v367 = vsel %vm323, %v284, 0
        %v370 = vsel %vm323, %v285, 0
        %v373 = vsel %vm323, %v302, 0
        %v376 = vsel %vm323, %v303, 0
        %v379 = vsel %vm323, %v304, 0
        %v382 = vsel %vm323, %v305, 0
        %v385 = vsel %vm323, %v306, 0
        %v388 = vsel %vm323, %v307, 0
        %v391 = vsel %vm323, %v308, 0
        %v394 = vsel %vm323, %v309, 0
        %v397 = vsel %vm323, %v310, 0
        %v400 = vsel %vm323, %v311, 0
        %v403 = vsel %vm323, %v312, 0
        %v406 = vsel %vm323, %v313, 0
        %v409 = vsel %vm323, %v314, 0
        %v412 = vsel %vm323, %v315, 0
        %v415 = vsel %vm323, %v316, 0
        %v418 = vsel %vm323, %v317, 0
        %420 = vmatpush.msra.mxu0 0.0
        %421 = vmatpush.msra.mxu0 0.0
        %422 = vmatpush.msra.mxu0 0.0
        %423 = vmatpush.msra.mxu0 0.0
        %424 = vmatpush.msra.mxu0 0.0
        %425 = vmatpush.msra.mxu0 0.0
        %426 = vmatpush.msra.mxu0 0.0
        %427 = vmatpush.msra.mxu0 0.0
        %428 = vmatpush.msra.mxu0 0.0
        %429 = vmatpush.msra.mxu0 0.0
        %430 = vmatpush.msra.mxu0 0.0
        %431 = vmatpush.msra.mxu0 0.0
        %432 = vmatpush.msra.mxu0 0.0
        %433 = vmatpush.msra.mxu0 0.0
        %434 = vmatpush.msra.mxu0 0.0
        %435 = vmatpush.msra.mxu0 %v318
        %436 = vmatmul.f32.gmra.mxu0 %v325
        %v437 = vpop.f32.mrf.mxu0
        %v438 = vadd.f32 %v321, %v437
        %439 = vmatmul.f32.gmra.mxu0 %v328
        %v440 = vpop.f32.mrf.mxu0
        %v441 = vadd.f32 %v321, %v440
        %442 = vmatmul.f32.gmra.mxu0 %v331
        %v443 = vpop.f32.mrf.mxu0
        %v444 = vadd.f32 %v321, %v443
        %445 = vmatmul.f32.gmra.mxu0 %v334
        %v446 = vpop.f32.mrf.mxu0
        %v447 = vadd.f32 %v321, %v446
        %448 = vmatmul.f32.gmra.mxu0 %v337
        %v449 = vpop.f32.mrf.mxu0
        %v450 = vadd.f32 %v321, %v449
        %451 = vmatmul.f32.gmra.mxu0 %v340
        %v452 = vpop.f32.mrf.mxu0
        %v453 = vadd.f32 %v321, %v452
        %454 = vmatmul.f32.gmra.mxu0 %v343
        %v455 = vpop.f32.mrf.mxu0
        %v456 = vadd.f32 %v321, %v455
        %457 = vmatmul.f32.gmra.mxu0 %v346
        %v458 = vpop.f32.mrf.mxu0
        %v459 = vadd.f32 %v321, %v458
        %460 = vmatmul.f32.gmra.mxu0 %v349
        %v461 = vpop.f32.mrf.mxu0
        %v462 = vadd.f32 %v321, %v461
        %463 = vmatmul.f32.gmra.mxu0 %v352
        %v464 = vpop.f32.mrf.mxu0
        %v465 = vadd.f32 %v321, %v464
        %466 = vmatmul.f32.gmra.mxu0 %v355
        %v467 = vpop.f32.mrf.mxu0
        %v468 = vadd.f32 %v321, %v467
        %469 = vmatmul.f32.gmra.mxu0 %v358
        %v470 = vpop.f32.mrf.mxu0
        %v471 = vadd.f32 %v321, %v470
        %472 = vmatmul.f32.gmra.mxu0 %v361
        %v473 = vpop.f32.mrf.mxu0
        %v474 = vadd.f32 %v321, %v473
        %475 = vmatmul.f32.gmra.mxu0 %v364
        %v476 = vpop.f32.mrf.mxu0
        %v477 = vadd.f32 %v321, %v476
        %478 = vmatmul.f32.gmra.mxu0 %v367
        %v479 = vpop.f32.mrf.mxu0
        %v480 = vadd.f32 %v321, %v479
        %481 = vmatmul.f32.gmra.mxu0 %v370
        %v482 = vpop.f32.mrf.mxu0
        %v483 = vadd.f32 %v321, %v482
        %484 = vmatmul.f32.gmra.mxu0 %v373
        %v485 = vpop.f32.mrf.mxu0
        %v486 = vadd.f32 %v321, %v485
        %487 = vmatmul.f32.gmra.mxu0 %v376
        %v488 = vpop.f32.mrf.mxu0
        %v489 = vadd.f32 %v321, %v488
        %490 = vmatmul.f32.gmra.mxu0 %v379
        %v491 = vpop.f32.mrf.mxu0
        %v492 = vadd.f32 %v321, %v491
        %493 = vmatmul.f32.gmra.mxu0 %v382
        %v494 = vpop.f32.mrf.mxu0
        %v495 = vadd.f32 %v321, %v494
        %496 = vmatmul.f32.gmra.mxu0 %v385
        %v497 = vpop.f32.mrf.mxu0
        %v498 = vadd.f32 %v321, %v497
        %499 = vmatmul.f32.gmra.mxu0 %v388
        %v500 = vpop.f32.mrf.mxu0
        %v501 = vadd.f32 %v321, %v500
        %502 = vmatmul.f32.gmra.mxu0 %v391
        %v503 = vpop.f32.mrf.mxu0
        %v504 = vadd.f32 %v321, %v503
        %505 = vmatmul.f32.gmra.mxu0 %v394
        %v506 = vpop.f32.mrf.mxu0
        %v507 = vadd.f32 %v321, %v506
        %508 = vmatmul.f32.gmra.mxu0 %v397
        %v509 = vpop.f32.mrf.mxu0
        %v510 = vadd.f32 %v321, %v509
        %511 = vmatmul.f32.gmra.mxu0 %v400
        %v512 = vpop.f32.mrf.mxu0
        %v513 = vadd.f32 %v321, %v512
        %514 = vmatmul.f32.gmra.mxu0 %v403
        %v515 = vpop.f32.mrf.mxu0
        %v516 = vadd.f32 %v321, %v515
        %517 = vmatmul.f32.gmra.mxu0 %v406
        %v518 = vpop.f32.mrf.mxu0
        %v519 = vadd.f32 %v321, %v518
        %520 = vmatmul.f32.gmra.mxu0 %v409
        %v521 = vpop.f32.mrf.mxu0
        %v522 = vadd.f32 %v321, %v521
        %523 = vmatmul.f32.gmra.mxu0 %v412
        %v524 = vpop.f32.mrf.mxu0
        %v525 = vadd.f32 %v321, %v524
        %526 = vmatmul.f32.gmra.mxu0 %v415
        %v527 = vpop.f32.mrf.mxu0
        %v528 = vadd.f32 %v321, %v527
        %529 = vmatmul.f32.gmra.mxu0 %v418
        %v530 = vpop.f32.mrf.mxu0
        %v531 = vadd.f32 %v321, %v530
        %532 = vdwg.mxu0
        %533 = vst.msk [vmem:[%s250] sm:$0xff] %vm323, %v438
        %534 = vst.msk [vmem:[%s250 + $0x8] sm:$0xff] %vm323, %v441
        %535 = vst.msk [vmem:[%s250 + $0x10] sm:$0xff] %vm323, %v444
        %536 = vst.msk [vmem:[%s250 + $0x18] sm:$0xff] %vm323, %v447
        %537 = vst.msk [vmem:[%s250 + $0x20] sm:$0xff] %vm323, %v450
        %538 = vst.msk [vmem:[%s250 + $0x28] sm:$0xff] %vm323, %v453
        %539 = vst.msk [vmem:[%s250 + $0x30] sm:$0xff] %vm323, %v456
        %540 = vst.msk [vmem:[%s250 + $0x38] sm:$0xff] %vm323, %v459
        %541 = vst.msk [vmem:[%s250 + $0x40] sm:$0xff] %vm323, %v462
        %542 = vst.msk [vmem:[%s250 + $0x48] sm:$0xff] %vm323, %v465
        %543 = vst.msk [vmem:[%s250 + $0x50] sm:$0xff] %vm323, %v468
        %544 = vst.msk [vmem:[%s250 + $0x58] sm:$0xff] %vm323, %v471
        %545 = vst.msk [vmem:[%s250 + $0x60] sm:$0xff] %vm323, %v474
        %546 = vst.msk [vmem:[%s250 + $0x68] sm:$0xff] %vm323, %v477
        %547 = vst.msk [vmem:[%s250 + $0x70] sm:$0xff] %vm323, %v480
        %548 = vst.msk [vmem:[%s250 + $0x78] sm:$0xff] %vm323, %v483
        %549 = vst.msk [vmem:[%s250 + $0x80] sm:$0xff] %vm323, %v486
        %550 = vst.msk [vmem:[%s250 + $0x88] sm:$0xff] %vm323, %v489
        %551 = vst.msk [vmem:[%s250 + $0x90] sm:$0xff] %vm323, %v492
        %552 = vst.msk [vmem:[%s250 + $0x98] sm:$0xff] %vm323, %v495
        %553 = vst.msk [vmem:[%s250 + $0xa0] sm:$0xff] %vm323, %v498
        %554 = vst.msk [vmem:[%s250 + $0xa8] sm:$0xff] %vm323, %v501
        %555 = vst.msk [vmem:[%s250 + $0xb0] sm:$0xff] %vm323, %v504
        %556 = vst.msk [vmem:[%s250 + $0xb8] sm:$0xff] %vm323, %v507
        %557 = vst.msk [vmem:[%s250 + $0xc0] sm:$0xff] %vm323, %v510
        %558 = vst.msk [vmem:[%s250 + $0xc8] sm:$0xff] %vm323, %v513
        %559 = vst.msk [vmem:[%s250 + $0xd0] sm:$0xff] %vm323, %v516
        %560 = vst.msk [vmem:[%s250 + $0xd8] sm:$0xff] %vm323, %v519
        %561 = vst.msk [vmem:[%s250 + $0xe0] sm:$0xff] %vm323, %v522
        %562 = vst.msk [vmem:[%s250 + $0xe8] sm:$0xff] %vm323, %v525
        %563 = vst.msk [vmem:[%s250 + $0xf0] sm:$0xff] %vm323, %v528
        %564 = vst.msk [vmem:[%s250 + $0xf8] sm:$0xff] %vm323, %v531
        %s565 = scalar_lea.vmem [#allocation4], 8
        %v566 = vld [vmem:[%s565] sm:$0xff]
        %s567 = scalar_lea.vmem [#allocation6], 1
        %v568 = vld [vmem:[%s567] sm:$0x1]
        %v570 = vperm.slane %v568, 0
        %572 = vmatpush.msra.mxu0 0.0
        %573 = vmatpush.msra.mxu0 0.0
        %574 = vmatpush.msra.mxu0 0.0
        %575 = vmatpush.msra.mxu0 0.0
        %576 = vmatpush.msra.mxu0 0.0
        %577 = vmatpush.msra.mxu0 0.0
        %578 = vmatpush.msra.mxu0 0.0
        %579 = vmatpush.msra.mxu0 0.0
        %580 = vmatpush.msra.mxu0 0.0
        %581 = vmatpush.msra.mxu0 0.0
        %582 = vmatpush.msra.mxu0 0.0
        %583 = vmatpush.msra.mxu0 0.0
        %584 = vmatpush.msra.mxu0 0.0
        %585 = vmatpush.msra.mxu0 0.0
        %586 = vmatpush.msra.mxu0 0.0
        %587 = vmatpush.msra.mxu0 %v566
        %588 = vmatmul.f32.gmra.mxu0 %v325
        %v589 = vpop.f32.mrf.mxu0
        %v590 = vadd.f32 %v570, %v589
        %591 = vmatmul.f32.gmra.mxu0 %v328
        %v592 = vpop.f32.mrf.mxu0
        %v593 = vadd.f32 %v570, %v592
        %594 = vmatmul.f32.gmra.mxu0 %v331
        %v595 = vpop.f32.mrf.mxu0
        %v596 = vadd.f32 %v570, %v595
        %597 = vmatmul.f32.gmra.mxu0 %v334
        %v598 = vpop.f32.mrf.mxu0
        %v599 = vadd.f32 %v570, %v598
        %600 = vmatmul.f32.gmra.mxu0 %v337
        %v601 = vpop.f32.mrf.mxu0
        %v602 = vadd.f32 %v570, %v601
        %603 = vmatmul.f32.gmra.mxu0 %v340
        %v604 = vpop.f32.mrf.mxu0
        %v605 = vadd.f32 %v570, %v604
        %606 = vmatmul.f32.gmra.mxu0 %v343
        %v607 = vpop.f32.mrf.mxu0
        %v608 = vadd.f32 %v570, %v607
        %609 = vmatmul.f32.gmra.mxu0 %v346
        %v610 = vpop.f32.mrf.mxu0
        %v611 = vadd.f32 %v570, %v610
        %612 = vmatmul.f32.gmra.mxu0 %v349
        %v613 = vpop.f32.mrf.mxu0
        %v614 = vadd.f32 %v570, %v613
        %615 = vmatmul.f32.gmra.mxu0 %v352
        %v616 = vpop.f32.mrf.mxu0
        %v617 = vadd.f32 %v570, %v616
        %618 = vmatmul.f32.gmra.mxu0 %v355
        %v619 = vpop.f32.mrf.mxu0
        %v620 = vadd.f32 %v570, %v619
        %621 = vmatmul.f32.gmra.mxu0 %v358
        %v622 = vpop.f32.mrf.mxu0
        %v623 = vadd.f32 %v570, %v622
        %624 = vmatmul.f32.gmra.mxu0 %v361
        %v625 = vpop.f32.mrf.mxu0
        %v626 = vadd.f32 %v570, %v625
        %627 = vmatmul.f32.gmra.mxu0 %v364
        %v628 = vpop.f32.mrf.mxu0
        %v629 = vadd.f32 %v570, %v628
        %630 = vmatmul.f32.gmra.mxu0 %v367
        %v631 = vpop.f32.mrf.mxu0
        %v632 = vadd.f32 %v570, %v631
        %633 = vmatmul.f32.gmra.mxu0 %v370
        %v634 = vpop.f32.mrf.mxu0
        %v635 = vadd.f32 %v570, %v634
        %636 = vmatmul.f32.gmra.mxu0 %v373
        %v637 = vpop.f32.mrf.mxu0
        %v638 = vadd.f32 %v570, %v637
        %639 = vmatmul.f32.gmra.mxu0 %v376
        %v640 = vpop.f32.mrf.mxu0
        %v641 = vadd.f32 %v570, %v640
        %642 = vmatmul.f32.gmra.mxu0 %v379
        %v643 = vpop.f32.mrf.mxu0
        %v644 = vadd.f32 %v570, %v643
        %645 = vmatmul.f32.gmra.mxu0 %v382
        %v646 = vpop.f32.mrf.mxu0
        %v647 = vadd.f32 %v570, %v646
        %648 = vmatmul.f32.gmra.mxu0 %v385
        %v649 = vpop.f32.mrf.mxu0
        %v650 = vadd.f32 %v570, %v649
        %651 = vmatmul.f32.gmra.mxu0 %v388
        %v652 = vpop.f32.mrf.mxu0
        %v653 = vadd.f32 %v570, %v652
        %654 = vmatmul.f32.gmra.mxu0 %v391
        %v655 = vpop.f32.mrf.mxu0
        %v656 = vadd.f32 %v570, %v655
        %657 = vmatmul.f32.gmra.mxu0 %v394
        %v658 = vpop.f32.mrf.mxu0
        %v659 = vadd.f32 %v570, %v658
        %660 = vmatmul.f32.gmra.mxu0 %v397
        %v661 = vpop.f32.mrf.mxu0
        %v662 = vadd.f32 %v570, %v661
        %663 = vmatmul.f32.gmra.mxu0 %v400
        %v664 = vpop.f32.mrf.mxu0
        %v665 = vadd.f32 %v570, %v664
        %666 = vmatmul.f32.gmra.mxu0 %v403
        %v667 = vpop.f32.mrf.mxu0
        %v668 = vadd.f32 %v570, %v667
        %669 = vmatmul.f32.gmra.mxu0 %v406
        %v670 = vpop.f32.mrf.mxu0
        %v671 = vadd.f32 %v570, %v670
        %672 = vmatmul.f32.gmra.mxu0 %v409
        %v673 = vpop.f32.mrf.mxu0
        %v674 = vadd.f32 %v570, %v673
        %675 = vmatmul.f32.gmra.mxu0 %v412
        %v676 = vpop.f32.mrf.mxu0
        %v677 = vadd.f32 %v570, %v676
        %678 = vmatmul.f32.gmra.mxu0 %v415
        %v679 = vpop.f32.mrf.mxu0
        %v680 = vadd.f32 %v570, %v679
        %681 = vmatmul.f32.gmra.mxu0 %v418
        %v682 = vpop.f32.mrf.mxu0
        %v683 = vadd.f32 %v570, %v682
        %684 = vdwg.mxu0
        %s685 = scalar_lea.vmem %s250, 256
        %686 = vst.msk [vmem:[%s685] sm:$0xff] %vm323, %v590
        %687 = vst.msk [vmem:[%s685 + $0x8] sm:$0xff] %vm323, %v593
        %688 = vst.msk [vmem:[%s685 + $0x10] sm:$0xff] %vm323, %v596
        %689 = vst.msk [vmem:[%s685 + $0x18] sm:$0xff] %vm323, %v599
        %690 = vst.msk [vmem:[%s685 + $0x20] sm:$0xff] %vm323, %v602
        %691 = vst.msk [vmem:[%s685 + $0x28] sm:$0xff] %vm323, %v605
        %692 = vst.msk [vmem:[%s685 + $0x30] sm:$0xff] %vm323, %v608
        %693 = vst.msk [vmem:[%s685 + $0x38] sm:$0xff] %vm323, %v611
        %694 = vst.msk [vmem:[%s685 + $0x40] sm:$0xff] %vm323, %v614
        %695 = vst.msk [vmem:[%s685 + $0x48] sm:$0xff] %vm323, %v617
        %696 = vst.msk [vmem:[%s685 + $0x50] sm:$0xff] %vm323, %v620
        %697 = vst.msk [vmem:[%s685 + $0x58] sm:$0xff] %vm323, %v623
        %698 = vst.msk [vmem:[%s685 + $0x60] sm:$0xff] %vm323, %v626
        %699 = vst.msk [vmem:[%s685 + $0x68] sm:$0xff] %vm323, %v629
        %700 = vst.msk [vmem:[%s685 + $0x70] sm:$0xff] %vm323, %v632
        %701 = vst.msk [vmem:[%s685 + $0x78] sm:$0xff] %vm323, %v635
        %702 = vst.msk [vmem:[%s685 + $0x80] sm:$0xff] %vm323, %v638
        %703 = vst.msk [vmem:[%s685 + $0x88] sm:$0xff] %vm323, %v641
        %704 = vst.msk [vmem:[%s685 + $0x90] sm:$0xff] %vm323, %v644
        %705 = vst.msk [vmem:[%s685 + $0x98] sm:$0xff] %vm323, %v647
        %706 = vst.msk [vmem:[%s685 + $0xa0] sm:$0xff] %vm323, %v650
        %707 = vst.msk [vmem:[%s685 + $0xa8] sm:$0xff] %vm323, %v653
        %708 = vst.msk [vmem:[%s685 + $0xb0] sm:$0xff] %vm323, %v656
        %709 = vst.msk [vmem:[%s685 + $0xb8] sm:$0xff] %vm323, %v659
        %710 = vst.msk [vmem:[%s685 + $0xc0] sm:$0xff] %vm323, %v662
        %711 = vst.msk [vmem:[%s685 + $0xc8] sm:$0xff] %vm323, %v665
        %712 = vst.msk [vmem:[%s685 + $0xd0] sm:$0xff] %vm323, %v668
        %713 = vst.msk [vmem:[%s685 + $0xd8] sm:$0xff] %vm323, %v671
        %714 = vst.msk [vmem:[%s685 + $0xe0] sm:$0xff] %vm323, %v674
        %715 = vst.msk [vmem:[%s685 + $0xe8] sm:$0xff] %vm323, %v677
        %716 = vst.msk [vmem:[%s685 + $0xf0] sm:$0xff] %vm323, %v680
        %717 = vst.msk [vmem:[%s685 + $0xf8] sm:$0xff] %vm323, %v683
        %s718 = scalar_lea.vmem [#allocation4], 16
        %v719 = vld [vmem:[%s718] sm:$0xff]
        %s720 = scalar_lea.vmem [#allocation6], 2
        %v721 = vld [vmem:[%s720] sm:$0x1]
        %v723 = vperm.slane %v721, 0
        %725 = vmatpush.msra.mxu0 0.0
        %726 = vmatpush.msra.mxu0 0.0
        %727 = vmatpush.msra.mxu0 0.0
        %728 = vmatpush.msra.mxu0 0.0
        %729 = vmatpush.msra.mxu0 0.0
        %730 = vmatpush.msra.mxu0 0.0
        %731 = vmatpush.msra.mxu0 0.0
        %732 = vmatpush.msra.mxu0 0.0
        %733 = vmatpush.msra.mxu0 0.0
        %734 = vmatpush.msra.mxu0 0.0
        %735 = vmatpush.msra.mxu0 0.0
        %736 = vmatpush.msra.mxu0 0.0
        %737 = vmatpush.msra.mxu0 0.0
        %738 = vmatpush.msra.mxu0 0.0
        %739 = vmatpush.msra.mxu0 0.0
        %740 = vmatpush.msra.mxu0 %v719
        %741 = vmatmul.f32.gmra.mxu0 %v325
        %v742 = vpop.f32.mrf.mxu0
        %v743 = vadd.f32 %v723, %v742
        %744 = vmatmul.f32.gmra.mxu0 %v328
        %v745 = vpop.f32.mrf.mxu0
        %v746 = vadd.f32 %v723, %v745
        %747 = vmatmul.f32.gmra.mxu0 %v331
        %v748 = vpop.f32.mrf.mxu0
        %v749 = vadd.f32 %v723, %v748
        %750 = vmatmul.f32.gmra.mxu0 %v334
        %v751 = vpop.f32.mrf.mxu0
        %v752 = vadd.f32 %v723, %v751
        %753 = vmatmul.f32.gmra.mxu0 %v337
        %v754 = vpop.f32.mrf.mxu0
        %v755 = vadd.f32 %v723, %v754
        %756 = vmatmul.f32.gmra.mxu0 %v340
        %v757 = vpop.f32.mrf.mxu0
        %v758 = vadd.f32 %v723, %v757
        %759 = vmatmul.f32.gmra.mxu0 %v343
        %v760 = vpop.f32.mrf.mxu0
        %v761 = vadd.f32 %v723, %v760
        %762 = vmatmul.f32.gmra.mxu0 %v346
        %v763 = vpop.f32.mrf.mxu0
        %v764 = vadd.f32 %v723, %v763
        %765 = vmatmul.f32.gmra.mxu0 %v349
        %v766 = vpop.f32.mrf.mxu0
        %v767 = vadd.f32 %v723, %v766
        %768 = vmatmul.f32.gmra.mxu0 %v352
        %v769 = vpop.f32.mrf.mxu0
        %v770 = vadd.f32 %v723, %v769
        %771 = vmatmul.f32.gmra.mxu0 %v355
        %v772 = vpop.f32.mrf.mxu0
        %v773 = vadd.f32 %v723, %v772
        %774 = vmatmul.f32.gmra.mxu0 %v358
        %v775 = vpop.f32.mrf.mxu0
        %v776 = vadd.f32 %v723, %v775
        %777 = vmatmul.f32.gmra.mxu0 %v361
        %v778 = vpop.f32.mrf.mxu0
        %v779 = vadd.f32 %v723, %v778
        %780 = vmatmul.f32.gmra.mxu0 %v364
        %v781 = vpop.f32.mrf.mxu0
        %v782 = vadd.f32 %v723, %v781
        %783 = vmatmul.f32.gmra.mxu0 %v367
        %v784 = vpop.f32.mrf.mxu0
        %v785 = vadd.f32 %v723, %v784
        %786 = vmatmul.f32.gmra.mxu0 %v370
        %v787 = vpop.f32.mrf.mxu0
        %v788 = vadd.f32 %v723, %v787
        %789 = vmatmul.f32.gmra.mxu0 %v373
        %v790 = vpop.f32.mrf.mxu0
        %v791 = vadd.f32 %v723, %v790
        %792 = vmatmul.f32.gmra.mxu0 %v376
        %v793 = vpop.f32.mrf.mxu0
        %v794 = vadd.f32 %v723, %v793
        %795 = vmatmul.f32.gmra.mxu0 %v379
        %v796 = vpop.f32.mrf.mxu0
        %v797 = vadd.f32 %v723, %v796
        %798 = vmatmul.f32.gmra.mxu0 %v382
        %v799 = vpop.f32.mrf.mxu0
        %v800 = vadd.f32 %v723, %v799
        %801 = vmatmul.f32.gmra.mxu0 %v385
        %v802 = vpop.f32.mrf.mxu0
        %v803 = vadd.f32 %v723, %v802
        %804 = vmatmul.f32.gmra.mxu0 %v388
        %v805 = vpop.f32.mrf.mxu0
        %v806 = vadd.f32 %v723, %v805
        %807 = vmatmul.f32.gmra.mxu0 %v391
        %v808 = vpop.f32.mrf.mxu0
        %v809 = vadd.f32 %v723, %v808
        %810 = vmatmul.f32.gmra.mxu0 %v394
        %v811 = vpop.f32.mrf.mxu0
        %v812 = vadd.f32 %v723, %v811
        %813 = vmatmul.f32.gmra.mxu0 %v397
        %v814 = vpop.f32.mrf.mxu0
        %v815 = vadd.f32 %v723, %v814
        %816 = vmatmul.f32.gmra.mxu0 %v400
        %v817 = vpop.f32.mrf.mxu0
        %v818 = vadd.f32 %v723, %v817
        %819 = vmatmul.f32.gmra.mxu0 %v403
        %v820 = vpop.f32.mrf.mxu0
        %v821 = vadd.f32 %v723, %v820
        %822 = vmatmul.f32.gmra.mxu0 %v406
        %v823 = vpop.f32.mrf.mxu0
        %v824 = vadd.f32 %v723, %v823
        %825 = vmatmul.f32.gmra.mxu0 %v409
        %v826 = vpop.f32.mrf.mxu0
        %v827 = vadd.f32 %v723, %v826
        %828 = vmatmul.f32.gmra.mxu0 %v412
        %v829 = vpop.f32.mrf.mxu0
        %v830 = vadd.f32 %v723, %v829
        %831 = vmatmul.f32.gmra.mxu0 %v415
        %v832 = vpop.f32.mrf.mxu0
        %v833 = vadd.f32 %v723, %v832
        %834 = vmatmul.f32.gmra.mxu0 %v418
        %v835 = vpop.f32.mrf.mxu0
        %v836 = vadd.f32 %v723, %v835
        %837 = vdwg.mxu0
        %s838 = scalar_lea.vmem %s250, 512
        %839 = vst.msk [vmem:[%s838] sm:$0xff] %vm323, %v743
        %840 = vst.msk [vmem:[%s838 + $0x8] sm:$0xff] %vm323, %v746
        %841 = vst.msk [vmem:[%s838 + $0x10] sm:$0xff] %vm323, %v749
        %842 = vst.msk [vmem:[%s838 + $0x18] sm:$0xff] %vm323, %v752
        %843 = vst.msk [vmem:[%s838 + $0x20] sm:$0xff] %vm323, %v755
        %844 = vst.msk [vmem:[%s838 + $0x28] sm:$0xff] %vm323, %v758
        %845 = vst.msk [vmem:[%s838 + $0x30] sm:$0xff] %vm323, %v761
        %846 = vst.msk [vmem:[%s838 + $0x38] sm:$0xff] %vm323, %v764
        %847 = vst.msk [vmem:[%s838 + $0x40] sm:$0xff] %vm323, %v767
        %848 = vst.msk [vmem:[%s838 + $0x48] sm:$0xff] %vm323, %v770
        %849 = vst.msk [vmem:[%s838 + $0x50] sm:$0xff] %vm323, %v773
        %850 = vst.msk [vmem:[%s838 + $0x58] sm:$0xff] %vm323, %v776
        %851 = vst.msk [vmem:[%s838 + $0x60] sm:$0xff] %vm323, %v779
        %852 = vst.msk [vmem:[%s838 + $0x68] sm:$0xff] %vm323, %v782
        %853 = vst.msk [vmem:[%s838 + $0x70] sm:$0xff] %vm323, %v785
        %854 = vst.msk [vmem:[%s838 + $0x78] sm:$0xff] %vm323, %v788
        %855 = vst.msk [vmem:[%s838 + $0x80] sm:$0xff] %vm323, %v791
        %856 = vst.msk [vmem:[%s838 + $0x88] sm:$0xff] %vm323, %v794
        %857 = vst.msk [vmem:[%s838 + $0x90] sm:$0xff] %vm323, %v797
        %858 = vst.msk [vmem:[%s838 + $0x98] sm:$0xff] %vm323, %v800
        %859 = vst.msk [vmem:[%s838 + $0xa0] sm:$0xff] %vm323, %v803
        %860 = vst.msk [vmem:[%s838 + $0xa8] sm:$0xff] %vm323, %v806
        %861 = vst.msk [vmem:[%s838 + $0xb0] sm:$0xff] %vm323, %v809
        %862 = vst.msk [vmem:[%s838 + $0xb8] sm:$0xff] %vm323, %v812
        %863 = vst.msk [vmem:[%s838 + $0xc0] sm:$0xff] %vm323, %v815
        %864 = vst.msk [vmem:[%s838 + $0xc8] sm:$0xff] %vm323, %v818
        %865 = vst.msk [vmem:[%s838 + $0xd0] sm:$0xff] %vm323, %v821
        %866 = vst.msk [vmem:[%s838 + $0xd8] sm:$0xff] %vm323, %v824
        %867 = vst.msk [vmem:[%s838 + $0xe0] sm:$0xff] %vm323, %v827
        %868 = vst.msk [vmem:[%s838 + $0xe8] sm:$0xff] %vm323, %v830
        %869 = vst.msk [vmem:[%s838 + $0xf0] sm:$0xff] %vm323, %v833
        %870 = vst.msk [vmem:[%s838 + $0xf8] sm:$0xff] %vm323, %v836
        %s871 = scalar_lea.vmem [#allocation4], 24
        %v872 = vld [vmem:[%s871] sm:$0xff]
        %s873 = scalar_lea.vmem [#allocation6], 3
        %v874 = vld [vmem:[%s873] sm:$0x1]
        %v876 = vperm.slane %v874, 0
        %878 = vmatpush.msra.mxu0 0.0
        %879 = vmatpush.msra.mxu0 0.0
        %880 = vmatpush.msra.mxu0 0.0
        %881 = vmatpush.msra.mxu0 0.0
        %882 = vmatpush.msra.mxu0 0.0
        %883 = vmatpush.msra.mxu0 0.0
        %884 = vmatpush.msra.mxu0 0.0
        %885 = vmatpush.msra.mxu0 0.0
        %886 = vmatpush.msra.mxu0 0.0
        %887 = vmatpush.msra.mxu0 0.0
        %888 = vmatpush.msra.mxu0 0.0
        %889 = vmatpush.msra.mxu0 0.0
        %890 = vmatpush.msra.mxu0 0.0
        %891 = vmatpush.msra.mxu0 0.0
        %892 = vmatpush.msra.mxu0 0.0
        %893 = vmatpush.msra.mxu0 %v872
        %894 = vmatmul.f32.gmra.mxu0 %v325
        %v895 = vpop.f32.mrf.mxu0
        %v896 = vadd.f32 %v876, %v895
        %897 = vmatmul.f32.gmra.mxu0 %v328
        %v898 = vpop.f32.mrf.mxu0
        %v899 = vadd.f32 %v876, %v898
        %900 = vmatmul.f32.gmra.mxu0 %v331
        %v901 = vpop.f32.mrf.mxu0
        %v902 = vadd.f32 %v876, %v901
        %903 = vmatmul.f32.gmra.mxu0 %v334
        %v904 = vpop.f32.mrf.mxu0
        %v905 = vadd.f32 %v876, %v904
        %906 = vmatmul.f32.gmra.mxu0 %v337
        %v907 = vpop.f32.mrf.mxu0
        %v908 = vadd.f32 %v876, %v907
        %909 = vmatmul.f32.gmra.mxu0 %v340
        %v910 = vpop.f32.mrf.mxu0
        %v911 = vadd.f32 %v876, %v910
        %912 = vmatmul.f32.gmra.mxu0 %v343
        %v913 = vpop.f32.mrf.mxu0
        %v914 = vadd.f32 %v876, %v913
        %915 = vmatmul.f32.gmra.mxu0 %v346
        %v916 = vpop.f32.mrf.mxu0
        %v917 = vadd.f32 %v876, %v916
        %918 = vmatmul.f32.gmra.mxu0 %v349
        %v919 = vpop.f32.mrf.mxu0
        %v920 = vadd.f32 %v876, %v919
        %921 = vmatmul.f32.gmra.mxu0 %v352
        %v922 = vpop.f32.mrf.mxu0
        %v923 = vadd.f32 %v876, %v922
        %924 = vmatmul.f32.gmra.mxu0 %v355
        %v925 = vpop.f32.mrf.mxu0
        %v926 = vadd.f32 %v876, %v925
        %927 = vmatmul.f32.gmra.mxu0 %v358
        %v928 = vpop.f32.mrf.mxu0
        %v929 = vadd.f32 %v876, %v928
        %930 = vmatmul.f32.gmra.mxu0 %v361
        %v931 = vpop.f32.mrf.mxu0
        %v932 = vadd.f32 %v876, %v931
        %933 = vmatmul.f32.gmra.mxu0 %v364
        %v934 = vpop.f32.mrf.mxu0
        %v935 = vadd.f32 %v876, %v934
        %936 = vmatmul.f32.gmra.mxu0 %v367
        %v937 = vpop.f32.mrf.mxu0
        %v938 = vadd.f32 %v876, %v937
        %939 = vmatmul.f32.gmra.mxu0 %v370
        %v940 = vpop.f32.mrf.mxu0
        %v941 = vadd.f32 %v876, %v940
        %942 = vmatmul.f32.gmra.mxu0 %v373
        %v943 = vpop.f32.mrf.mxu0
        %v944 = vadd.f32 %v876, %v943
        %945 = vmatmul.f32.gmra.mxu0 %v376
        %v946 = vpop.f32.mrf.mxu0
        %v947 = vadd.f32 %v876, %v946
        %948 = vmatmul.f32.gmra.mxu0 %v379
        %v949 = vpop.f32.mrf.mxu0
        %v950 = vadd.f32 %v876, %v949
        %951 = vmatmul.f32.gmra.mxu0 %v382
        %v952 = vpop.f32.mrf.mxu0
        %v953 = vadd.f32 %v876, %v952
        %954 = vmatmul.f32.gmra.mxu0 %v385
        %v955 = vpop.f32.mrf.mxu0
        %v956 = vadd.f32 %v876, %v955
        %957 = vmatmul.f32.gmra.mxu0 %v388
        %v958 = vpop.f32.mrf.mxu0
        %v959 = vadd.f32 %v876, %v958
        %960 = vmatmul.f32.gmra.mxu0 %v391
        %v961 = vpop.f32.mrf.mxu0
        %v962 = vadd.f32 %v876, %v961
        %963 = vmatmul.f32.gmra.mxu0 %v394
        %v964 = vpop.f32.mrf.mxu0
        %v965 = vadd.f32 %v876, %v964
        %966 = vmatmul.f32.gmra.mxu0 %v397
        %v967 = vpop.f32.mrf.mxu0
        %v968 = vadd.f32 %v876, %v967
        %969 = vmatmul.f32.gmra.mxu0 %v400
        %v970 = vpop.f32.mrf.mxu0
        %v971 = vadd.f32 %v876, %v970
        %972 = vmatmul.f32.gmra.mxu0 %v403
        %v973 = vpop.f32.mrf.mxu0
        %v974 = vadd.f32 %v876, %v973
        %975 = vmatmul.f32.gmra.mxu0 %v406
        %v976 = vpop.f32.mrf.mxu0
        %v977 = vadd.f32 %v876, %v976
        %978 = vmatmul.f32.gmra.mxu0 %v409
        %v979 = vpop.f32.mrf.mxu0
        %v980 = vadd.f32 %v876, %v979
        %981 = vmatmul.f32.gmra.mxu0 %v412
        %v982 = vpop.f32.mrf.mxu0
        %v983 = vadd.f32 %v876, %v982
        %984 = vmatmul.f32.gmra.mxu0 %v415
        %v985 = vpop.f32.mrf.mxu0
        %v986 = vadd.f32 %v876, %v985
        %987 = vmatmul.f32.gmra.mxu0 %v418
        %v988 = vpop.f32.mrf.mxu0
        %v989 = vadd.f32 %v876, %v988
        %990 = vdwg.mxu0
        %s991 = scalar_lea.vmem %s250, 768
        %992 = vst.msk [vmem:[%s991] sm:$0xff] %vm323, %v896
        %993 = vst.msk [vmem:[%s991 + $0x8] sm:$0xff] %vm323, %v899
        %994 = vst.msk [vmem:[%s991 + $0x10] sm:$0xff] %vm323, %v902
        %995 = vst.msk [vmem:[%s991 + $0x18] sm:$0xff] %vm323, %v905
        %996 = vst.msk [vmem:[%s991 + $0x20] sm:$0xff] %vm323, %v908
        %997 = vst.msk [vmem:[%s991 + $0x28] sm:$0xff] %vm323, %v911
        %998 = vst.msk [vmem:[%s991 + $0x30] sm:$0xff] %vm323, %v914
        %999 = vst.msk [vmem:[%s991 + $0x38] sm:$0xff] %vm323, %v917
        %1000 = vst.msk [vmem:[%s991 + $0x40] sm:$0xff] %vm323, %v920
        %1001 = vst.msk [vmem:[%s991 + $0x48] sm:$0xff] %vm323, %v923
        %1002 = vst.msk [vmem:[%s991 + $0x50] sm:$0xff] %vm323, %v926
        %1003 = vst.msk [vmem:[%s991 + $0x58] sm:$0xff] %vm323, %v929
        %1004 = vst.msk [vmem:[%s991 + $0x60] sm:$0xff] %vm323, %v932
        %1005 = vst.msk [vmem:[%s991 + $0x68] sm:$0xff] %vm323, %v935
        %1006 = vst.msk [vmem:[%s991 + $0x70] sm:$0xff] %vm323, %v938
        %1007 = vst.msk [vmem:[%s991 + $0x78] sm:$0xff] %vm323, %v941
        %1008 = vst.msk [vmem:[%s991 + $0x80] sm:$0xff] %vm323, %v944
        %1009 = vst.msk [vmem:[%s991 + $0x88] sm:$0xff] %vm323, %v947
        %1010 = vst.msk [vmem:[%s991 + $0x90] sm:$0xff] %vm323, %v950
        %1011 = vst.msk [vmem:[%s991 + $0x98] sm:$0xff] %vm323, %v953
        %1012 = vst.msk [vmem:[%s991 + $0xa0] sm:$0xff] %vm323, %v956
        %1013 = vst.msk [vmem:[%s991 + $0xa8] sm:$0xff] %vm323, %v959
        %1014 = vst.msk [vmem:[%s991 + $0xb0] sm:$0xff] %vm323, %v962
        %1015 = vst.msk [vmem:[%s991 + $0xb8] sm:$0xff] %vm323, %v965
        %1016 = vst.msk [vmem:[%s991 + $0xc0] sm:$0xff] %vm323, %v968
        %1017 = vst.msk [vmem:[%s991 + $0xc8] sm:$0xff] %vm323, %v971
        %1018 = vst.msk [vmem:[%s991 + $0xd0] sm:$0xff] %vm323, %v974
        %1019 = vst.msk [vmem:[%s991 + $0xd8] sm:$0xff] %vm323, %v977
        %1020 = vst.msk [vmem:[%s991 + $0xe0] sm:$0xff] %vm323, %v980
        %1021 = vst.msk [vmem:[%s991 + $0xe8] sm:$0xff] %vm323, %v983
        %1022 = vst.msk [vmem:[%s991 + $0xf0] sm:$0xff] %vm323, %v986
        %1023 = vst.msk [vmem:[%s991 + $0xf8] sm:$0xff] %vm323, %v989
        %s1024 = scalar_lea.vmem [#allocation4], 32
        %v1025 = vld [vmem:[%s1024] sm:$0xff]
        %s1026 = scalar_lea.vmem [#allocation6], 4
        %v1027 = vld [vmem:[%s1026] sm:$0x1]
        %v1029 = vperm.slane %v1027, 0
        %1031 = vmatpush.msra.mxu0 0.0
        %1032 = vmatpush.msra.mxu0 0.0
        %1033 = vmatpush.msra.mxu0 0.0
        %1034 = vmatpush.msra.mxu0 0.0
        %1035 = vmatpush.msra.mxu0 0.0
        %1036 = vmatpush.msra.mxu0 0.0
        %1037 = vmatpush.msra.mxu0 0.0
        %1038 = vmatpush.msra.mxu0 0.0
        %1039 = vmatpush.msra.mxu0 0.0
        %1040 = vmatpush.msra.mxu0 0.0
        %1041 = vmatpush.msra.mxu0 0.0
        %1042 = vmatpush.msra.mxu0 0.0
        %1043 = vmatpush.msra.mxu0 0.0
        %1044 = vmatpush.msra.mxu0 0.0
        %1045 = vmatpush.msra.mxu0 0.0
        %1046 = vmatpush.msra.mxu0 %v1025
        %1047 = vmatmul.f32.gmra.mxu0 %v325
        %v1048 = vpop.f32.mrf.mxu0
        %v1049 = vadd.f32 %v1029, %v1048
        %1050 = vmatmul.f32.gmra.mxu0 %v328
        %v1051 = vpop.f32.mrf.mxu0
        %v1052 = vadd.f32 %v1029, %v1051
        %1053 = vmatmul.f32.gmra.mxu0 %v331
        %v1054 = vpop.f32.mrf.mxu0
        %v1055 = vadd.f32 %v1029, %v1054
        %1056 = vmatmul.f32.gmra.mxu0 %v334
        %v1057 = vpop.f32.mrf.mxu0
        %v1058 = vadd.f32 %v1029, %v1057
        %1059 = vmatmul.f32.gmra.mxu0 %v337
        %v1060 = vpop.f32.mrf.mxu0
        %v1061 = vadd.f32 %v1029, %v1060
        %1062 = vmatmul.f32.gmra.mxu0 %v340
        %v1063 = vpop.f32.mrf.mxu0
        %v1064 = vadd.f32 %v1029, %v1063
        %1065 = vmatmul.f32.gmra.mxu0 %v343
        %v1066 = vpop.f32.mrf.mxu0
        %v1067 = vadd.f32 %v1029, %v1066
        %1068 = vmatmul.f32.gmra.mxu0 %v346
        %v1069 = vpop.f32.mrf.mxu0
        %v1070 = vadd.f32 %v1029, %v1069
        %1071 = vmatmul.f32.gmra.mxu0 %v349
        %v1072 = vpop.f32.mrf.mxu0
        %v1073 = vadd.f32 %v1029, %v1072
        %1074 = vmatmul.f32.gmra.mxu0 %v352
        %v1075 = vpop.f32.mrf.mxu0
        %v1076 = vadd.f32 %v1029, %v1075
        %1077 = vmatmul.f32.gmra.mxu0 %v355
        %v1078 = vpop.f32.mrf.mxu0
        %v1079 = vadd.f32 %v1029, %v1078
        %1080 = vmatmul.f32.gmra.mxu0 %v358
        %v1081 = vpop.f32.mrf.mxu0
        %v1082 = vadd.f32 %v1029, %v1081
        %1083 = vmatmul.f32.gmra.mxu0 %v361
        %v1084 = vpop.f32.mrf.mxu0
        %v1085 = vadd.f32 %v1029, %v1084
        %1086 = vmatmul.f32.gmra.mxu0 %v364
        %v1087 = vpop.f32.mrf.mxu0
        %v1088 = vadd.f32 %v1029, %v1087
        %1089 = vmatmul.f32.gmra.mxu0 %v367
        %v1090 = vpop.f32.mrf.mxu0
        %v1091 = vadd.f32 %v1029, %v1090
        %1092 = vmatmul.f32.gmra.mxu0 %v370
        %v1093 = vpop.f32.mrf.mxu0
        %v1094 = vadd.f32 %v1029, %v1093
        %1095 = vmatmul.f32.gmra.mxu0 %v373
        %v1096 = vpop.f32.mrf.mxu0
        %v1097 = vadd.f32 %v1029, %v1096
        %1098 = vmatmul.f32.gmra.mxu0 %v376
        %v1099 = vpop.f32.mrf.mxu0
        %v1100 = vadd.f32 %v1029, %v1099
        %1101 = vmatmul.f32.gmra.mxu0 %v379
        %v1102 = vpop.f32.mrf.mxu0
        %v1103 = vadd.f32 %v1029, %v1102
        %1104 = vmatmul.f32.gmra.mxu0 %v382
        %v1105 = vpop.f32.mrf.mxu0
        %v1106 = vadd.f32 %v1029, %v1105
        %1107 = vmatmul.f32.gmra.mxu0 %v385
        %v1108 = vpop.f32.mrf.mxu0
        %v1109 = vadd.f32 %v1029, %v1108
        %1110 = vmatmul.f32.gmra.mxu0 %v388
        %v1111 = vpop.f32.mrf.mxu0
        %v1112 = vadd.f32 %v1029, %v1111
        %1113 = vmatmul.f32.gmra.mxu0 %v391
        %v1114 = vpop.f32.mrf.mxu0
        %v1115 = vadd.f32 %v1029, %v1114
        %1116 = vmatmul.f32.gmra.mxu0 %v394
        %v1117 = vpop.f32.mrf.mxu0
        %v1118 = vadd.f32 %v1029, %v1117
        %1119 = vmatmul.f32.gmra.mxu0 %v397
        %v1120 = vpop.f32.mrf.mxu0
        %v1121 = vadd.f32 %v1029, %v1120
        %1122 = vmatmul.f32.gmra.mxu0 %v400
        %v1123 = vpop.f32.mrf.mxu0
        %v1124 = vadd.f32 %v1029, %v1123
        %1125 = vmatmul.f32.gmra.mxu0 %v403
        %v1126 = vpop.f32.mrf.mxu0
        %v1127 = vadd.f32 %v1029, %v1126
        %1128 = vmatmul.f32.gmra.mxu0 %v406
        %v1129 = vpop.f32.mrf.mxu0
        %v1130 = vadd.f32 %v1029, %v1129
        %1131 = vmatmul.f32.gmra.mxu0 %v409
        %v1132 = vpop.f32.mrf.mxu0
        %v1133 = vadd.f32 %v1029, %v1132
        %1134 = vmatmul.f32.gmra.mxu0 %v412
        %v1135 = vpop.f32.mrf.mxu0
        %v1136 = vadd.f32 %v1029, %v1135
        %1137 = vmatmul.f32.gmra.mxu0 %v415
        %v1138 = vpop.f32.mrf.mxu0
        %v1139 = vadd.f32 %v1029, %v1138
        %1140 = vmatmul.f32.gmra.mxu0 %v418
        %v1141 = vpop.f32.mrf.mxu0
        %v1142 = vadd.f32 %v1029, %v1141
        %1143 = vdwg.mxu0
        %s1144 = scalar_lea.vmem %s250, 1024
        %1145 = vst.msk [vmem:[%s1144] sm:$0xff] %vm323, %v1049
        %1146 = vst.msk [vmem:[%s1144 + $0x8] sm:$0xff] %vm323, %v1052
        %1147 = vst.msk [vmem:[%s1144 + $0x10] sm:$0xff] %vm323, %v1055
        %1148 = vst.msk [vmem:[%s1144 + $0x18] sm:$0xff] %vm323, %v1058
        %1149 = vst.msk [vmem:[%s1144 + $0x20] sm:$0xff] %vm323, %v1061
        %1150 = vst.msk [vmem:[%s1144 + $0x28] sm:$0xff] %vm323, %v1064
        %1151 = vst.msk [vmem:[%s1144 + $0x30] sm:$0xff] %vm323, %v1067
        %1152 = vst.msk [vmem:[%s1144 + $0x38] sm:$0xff] %vm323, %v1070
        %1153 = vst.msk [vmem:[%s1144 + $0x40] sm:$0xff] %vm323, %v1073
        %1154 = vst.msk [vmem:[%s1144 + $0x48] sm:$0xff] %vm323, %v1076
        %1155 = vst.msk [vmem:[%s1144 + $0x50] sm:$0xff] %vm323, %v1079
        %1156 = vst.msk [vmem:[%s1144 + $0x58] sm:$0xff] %vm323, %v1082
        %1157 = vst.msk [vmem:[%s1144 + $0x60] sm:$0xff] %vm323, %v1085
        %1158 = vst.msk [vmem:[%s1144 + $0x68] sm:$0xff] %vm323, %v1088
        %1159 = vst.msk [vmem:[%s1144 + $0x70] sm:$0xff] %vm323, %v1091
        %1160 = vst.msk [vmem:[%s1144 + $0x78] sm:$0xff] %vm323, %v1094
        %1161 = vst.msk [vmem:[%s1144 + $0x80] sm:$0xff] %vm323, %v1097
        %1162 = vst.msk [vmem:[%s1144 + $0x88] sm:$0xff] %vm323, %v1100
        %1163 = vst.msk [vmem:[%s1144 + $0x90] sm:$0xff] %vm323, %v1103
        %1164 = vst.msk [vmem:[%s1144 + $0x98] sm:$0xff] %vm323, %v1106
        %1165 = vst.msk [vmem:[%s1144 + $0xa0] sm:$0xff] %vm323, %v1109
        %1166 = vst.msk [vmem:[%s1144 + $0xa8] sm:$0xff] %vm323, %v1112
        %1167 = vst.msk [vmem:[%s1144 + $0xb0] sm:$0xff] %vm323, %v1115
        %1168 = vst.msk [vmem:[%s1144 + $0xb8] sm:$0xff] %vm323, %v1118
        %1169 = vst.msk [vmem:[%s1144 + $0xc0] sm:$0xff] %vm323, %v1121
        %1170 = vst.msk [vmem:[%s1144 + $0xc8] sm:$0xff] %vm323, %v1124
        %1171 = vst.msk [vmem:[%s1144 + $0xd0] sm:$0xff] %vm323, %v1127
        %1172 = vst.msk [vmem:[%s1144 + $0xd8] sm:$0xff] %vm323, %v1130
        %1173 = vst.msk [vmem:[%s1144 + $0xe0] sm:$0xff] %vm323, %v1133
        %1174 = vst.msk [vmem:[%s1144 + $0xe8] sm:$0xff] %vm323, %v1136
        %1175 = vst.msk [vmem:[%s1144 + $0xf0] sm:$0xff] %vm323, %v1139
        %1176 = vst.msk [vmem:[%s1144 + $0xf8] sm:$0xff] %vm323, %v1142
        %s1177 = scalar_lea.vmem [#allocation4], 40
        %v1178 = vld [vmem:[%s1177] sm:$0xff]
        %s1179 = scalar_lea.vmem [#allocation6], 5
        %v1180 = vld [vmem:[%s1179] sm:$0x1]
        %v1182 = vperm.slane %v1180, 0
        %1184 = vmatpush.msra.mxu0 0.0
        %1185 = vmatpush.msra.mxu0 0.0
        %1186 = vmatpush.msra.mxu0 0.0
        %1187 = vmatpush.msra.mxu0 0.0
        %1188 = vmatpush.msra.mxu0 0.0
        %1189 = vmatpush.msra.mxu0 0.0
        %1190 = vmatpush.msra.mxu0 0.0
        %1191 = vmatpush.msra.mxu0 0.0
        %1192 = vmatpush.msra.mxu0 0.0
        %1193 = vmatpush.msra.mxu0 0.0
        %1194 = vmatpush.msra.mxu0 0.0
        %1195 = vmatpush.msra.mxu0 0.0
        %1196 = vmatpush.msra.mxu0 0.0
        %1197 = vmatpush.msra.mxu0 0.0
        %1198 = vmatpush.msra.mxu0 0.0
        %1199 = vmatpush.msra.mxu0 %v1178
        %1200 = vmatmul.f32.gmra.mxu0 %v325
        %v1201 = vpop.f32.mrf.mxu0
        %v1202 = vadd.f32 %v1182, %v1201
        %1203 = vmatmul.f32.gmra.mxu0 %v328
        %v1204 = vpop.f32.mrf.mxu0
        %v1205 = vadd.f32 %v1182, %v1204
        %1206 = vmatmul.f32.gmra.mxu0 %v331
        %v1207 = vpop.f32.mrf.mxu0
        %v1208 = vadd.f32 %v1182, %v1207
        %1209 = vmatmul.f32.gmra.mxu0 %v334
        %v1210 = vpop.f32.mrf.mxu0
        %v1211 = vadd.f32 %v1182, %v1210
        %1212 = vmatmul.f32.gmra.mxu0 %v337
        %v1213 = vpop.f32.mrf.mxu0
        %v1214 = vadd.f32 %v1182, %v1213
        %1215 = vmatmul.f32.gmra.mxu0 %v340
        %v1216 = vpop.f32.mrf.mxu0
        %v1217 = vadd.f32 %v1182, %v1216
        %1218 = vmatmul.f32.gmra.mxu0 %v343
        %v1219 = vpop.f32.mrf.mxu0
        %v1220 = vadd.f32 %v1182, %v1219
        %1221 = vmatmul.f32.gmra.mxu0 %v346
        %v1222 = vpop.f32.mrf.mxu0
        %v1223 = vadd.f32 %v1182, %v1222
        %1224 = vmatmul.f32.gmra.mxu0 %v349
        %v1225 = vpop.f32.mrf.mxu0
        %v1226 = vadd.f32 %v1182, %v1225
        %1227 = vmatmul.f32.gmra.mxu0 %v352
        %v1228 = vpop.f32.mrf.mxu0
        %v1229 = vadd.f32 %v1182, %v1228
        %1230 = vmatmul.f32.gmra.mxu0 %v355
        %v1231 = vpop.f32.mrf.mxu0
        %v1232 = vadd.f32 %v1182, %v1231
        %1233 = vmatmul.f32.gmra.mxu0 %v358
        %v1234 = vpop.f32.mrf.mxu0
        %v1235 = vadd.f32 %v1182, %v1234
        %1236 = vmatmul.f32.gmra.mxu0 %v361
        %v1237 = vpop.f32.mrf.mxu0
        %v1238 = vadd.f32 %v1182, %v1237
        %1239 = vmatmul.f32.gmra.mxu0 %v364
        %v1240 = vpop.f32.mrf.mxu0
        %v1241 = vadd.f32 %v1182, %v1240
        %1242 = vmatmul.f32.gmra.mxu0 %v367
        %v1243 = vpop.f32.mrf.mxu0
        %v1244 = vadd.f32 %v1182, %v1243
        %1245 = vmatmul.f32.gmra.mxu0 %v370
        %v1246 = vpop.f32.mrf.mxu0
        %v1247 = vadd.f32 %v1182, %v1246
        %1248 = vmatmul.f32.gmra.mxu0 %v373
        %v1249 = vpop.f32.mrf.mxu0
        %v1250 = vadd.f32 %v1182, %v1249
        %1251 = vmatmul.f32.gmra.mxu0 %v376
        %v1252 = vpop.f32.mrf.mxu0
        %v1253 = vadd.f32 %v1182, %v1252
        %1254 = vmatmul.f32.gmra.mxu0 %v379
        %v1255 = vpop.f32.mrf.mxu0
        %v1256 = vadd.f32 %v1182, %v1255
        %1257 = vmatmul.f32.gmra.mxu0 %v382
        %v1258 = vpop.f32.mrf.mxu0
        %v1259 = vadd.f32 %v1182, %v1258
        %1260 = vmatmul.f32.gmra.mxu0 %v385
        %v1261 = vpop.f32.mrf.mxu0
        %v1262 = vadd.f32 %v1182, %v1261
        %1263 = vmatmul.f32.gmra.mxu0 %v388
        %v1264 = vpop.f32.mrf.mxu0
        %v1265 = vadd.f32 %v1182, %v1264
        %1266 = vmatmul.f32.gmra.mxu0 %v391
        %v1267 = vpop.f32.mrf.mxu0
        %v1268 = vadd.f32 %v1182, %v1267
        %1269 = vmatmul.f32.gmra.mxu0 %v394
        %v1270 = vpop.f32.mrf.mxu0
        %v1271 = vadd.f32 %v1182, %v1270
        %1272 = vmatmul.f32.gmra.mxu0 %v397
        %v1273 = vpop.f32.mrf.mxu0
        %v1274 = vadd.f32 %v1182, %v1273
        %1275 = vmatmul.f32.gmra.mxu0 %v400
        %v1276 = vpop.f32.mrf.mxu0
        %v1277 = vadd.f32 %v1182, %v1276
        %1278 = vmatmul.f32.gmra.mxu0 %v403
        %v1279 = vpop.f32.mrf.mxu0
        %v1280 = vadd.f32 %v1182, %v1279
        %1281 = vmatmul.f32.gmra.mxu0 %v406
        %v1282 = vpop.f32.mrf.mxu0
        %v1283 = vadd.f32 %v1182, %v1282
        %1284 = vmatmul.f32.gmra.mxu0 %v409
        %v1285 = vpop.f32.mrf.mxu0
        %v1286 = vadd.f32 %v1182, %v1285
        %1287 = vmatmul.f32.gmra.mxu0 %v412
        %v1288 = vpop.f32.mrf.mxu0
        %v1289 = vadd.f32 %v1182, %v1288
        %1290 = vmatmul.f32.gmra.mxu0 %v415
        %v1291 = vpop.f32.mrf.mxu0
        %v1292 = vadd.f32 %v1182, %v1291
        %1293 = vmatmul.f32.gmra.mxu0 %v418
        %v1294 = vpop.f32.mrf.mxu0
        %v1295 = vadd.f32 %v1182, %v1294
        %1296 = vdwg.mxu0
        %s1297 = scalar_lea.vmem %s250, 1280
        %1298 = vst.msk [vmem:[%s1297] sm:$0xff] %vm323, %v1202
        %1299 = vst.msk [vmem:[%s1297 + $0x8] sm:$0xff] %vm323, %v1205
        %1300 = vst.msk [vmem:[%s1297 + $0x10] sm:$0xff] %vm323, %v1208
        %1301 = vst.msk [vmem:[%s1297 + $0x18] sm:$0xff] %vm323, %v1211
        %1302 = vst.msk [vmem:[%s1297 + $0x20] sm:$0xff] %vm323, %v1214
        %1303 = vst.msk [vmem:[%s1297 + $0x28] sm:$0xff] %vm323, %v1217
        %1304 = vst.msk [vmem:[%s1297 + $0x30] sm:$0xff] %vm323, %v1220
        %1305 = vst.msk [vmem:[%s1297 + $0x38] sm:$0xff] %vm323, %v1223
        %1306 = vst.msk [vmem:[%s1297 + $0x40] sm:$0xff] %vm323, %v1226
        %1307 = vst.msk [vmem:[%s1297 + $0x48] sm:$0xff] %vm323, %v1229
        %1308 = vst.msk [vmem:[%s1297 + $0x50] sm:$0xff] %vm323, %v1232
        %1309 = vst.msk [vmem:[%s1297 + $0x58] sm:$0xff] %vm323, %v1235
        %1310 = vst.msk [vmem:[%s1297 + $0x60] sm:$0xff] %vm323, %v1238
        %1311 = vst.msk [vmem:[%s1297 + $0x68] sm:$0xff] %vm323, %v1241
        %1312 = vst.msk [vmem:[%s1297 + $0x70] sm:$0xff] %vm323, %v1244
        %1313 = vst.msk [vmem:[%s1297 + $0x78] sm:$0xff] %vm323, %v1247
        %1314 = vst.msk [vmem:[%s1297 + $0x80] sm:$0xff] %vm323, %v1250
        %1315 = vst.msk [vmem:[%s1297 + $0x88] sm:$0xff] %vm323, %v1253
        %1316 = vst.msk [vmem:[%s1297 + $0x90] sm:$0xff] %vm323, %v1256
        %1317 = vst.msk [vmem:[%s1297 + $0x98] sm:$0xff] %vm323, %v1259
        %1318 = vst.msk [vmem:[%s1297 + $0xa0] sm:$0xff] %vm323, %v1262
        %1319 = vst.msk [vmem:[%s1297 + $0xa8] sm:$0xff] %vm323, %v1265
        %1320 = vst.msk [vmem:[%s1297 + $0xb0] sm:$0xff] %vm323, %v1268
        %1321 = vst.msk [vmem:[%s1297 + $0xb8] sm:$0xff] %vm323, %v1271
        %1322 = vst.msk [vmem:[%s1297 + $0xc0] sm:$0xff] %vm323, %v1274
        %1323 = vst.msk [vmem:[%s1297 + $0xc8] sm:$0xff] %vm323, %v1277
        %1324 = vst.msk [vmem:[%s1297 + $0xd0] sm:$0xff] %vm323, %v1280
        %1325 = vst.msk [vmem:[%s1297 + $0xd8] sm:$0xff] %vm323, %v1283
        %1326 = vst.msk [vmem:[%s1297 + $0xe0] sm:$0xff] %vm323, %v1286
        %1327 = vst.msk [vmem:[%s1297 + $0xe8] sm:$0xff] %vm323, %v1289
        %1328 = vst.msk [vmem:[%s1297 + $0xf0] sm:$0xff] %vm323, %v1292
        %1329 = vst.msk [vmem:[%s1297 + $0xf8] sm:$0xff] %vm323, %v1295
        %s1330 = smul.u32 32, %s23
        %p1331 = scmp.lt.s32.totalorder %s22, 1
        %s1332 = scalar_select %p1331, %s22, 1
        %p1333 = scmp.lt.s32.totalorder %s1330, 31
        %s1334 = scalar_select %p1333, %s1330, 31
        %s1335 = smul.addr %s1332, 192
        %s1336 = sadd.s32 %s1334, %s1335
        %s1337 = smul.addr %s1336, 8
        %s1338 = scalar_lea.vmem %s3, %s1337
        // Predicated region
        $region45: #{tpu_custom_call.1} parent=31 // pred_check
          %p1339 = pneg %p120
        $region46: #{tpu_custom_call.1} parent=31 // pred_check_branch
          %1341 = sbr.rel (%p1339) target = $region48
        $region47: #{tpu_custom_call.1} parent=31 // pred_region
          %s1342 = smul.u32 32, %s23
        $region48: #{tpu_custom_call.1} parent=31 // pred_fallthru
          _
      $region32: #{tpu_custom_call.1} parent=5 // pred_fallthru
        _
      %p1343 = scmp.le.s32.totalorder 2, %s13
      // Predicated region
      $region49: #{tpu_custom_call.1} parent=5 // pred_check
        %p1344 = pneg %p1343
      $region50: #{tpu_custom_call.1} parent=5 // pred_check_branch
        %1346 = sbr.rel (%p1344) target = $region52
      $region51: #{tpu_custom_call.1} parent=5 // pred_region
        %s1347 = ssub.s32 %s13, 2
        // Predicated region
        $region53: #{tpu_custom_call.1} parent=51 // pred_check
          %p1348 = pneg %p126
        $region54: #{tpu_custom_call.1} parent=51 // pred_check_branch
          %1350 = sbr.rel (%p1348) target = $region56
        $region55: #{tpu_custom_call.1} parent=51 // pred_region
          %s1351 = smul.u32 32, %s25
          %p1352 = scmp.lt.s32.totalorder %s24, 1
          %s1353 = scalar_select %p1352, %s24, 1
          %p1354 = scmp.lt.s32.totalorder %s1351, 31
          %s1355 = scalar_select %p1354, %s1351, 31
          %s1356 = smul.addr %s1353, 192
          %s1357 = sadd.s32 %s1355, %s1356
          %s1358 = smul.addr %s1357, 8
          %s1359 = scalar_lea.vmem %s3, %s1358
        $region56: #{tpu_custom_call.1} parent=51 // pred_fallthru
          _
      $region52: #{tpu_custom_call.1} parent=5 // pred_fallthru
        _
    $region6: #{tpu_custom_call.1} parent=1 // loop_footer
      %s17 = sadd.s32 1, %s13
    $region7: #{tpu_custom_call.1} parent=1 // loop_footer_branch
      %12 = sbr.rel target = $region3
    $region8: #{tpu_custom_call.1} parent=1 // loop_exit
      _
    %1360 = vsyncpa [#allocation3], 1
    %s1361 = scalar_lea.sflag [#allocation3], 1
    %1362 = vsyncpa %s1361, 1
    %1363 = vsyncpa [#allocation5], 1

</llo_original>
